<compile_context>
chip_gen: v5e
topology: v5e:2x2
jax: 0.10.0
libtpu: 0.0.40
codegen_flags: <defaults>
</compile_context>

<pallas_src>
import functools

import jax
import jax.numpy as jnp
from jax.experimental import pallas as pl
from jax.experimental.pallas import tpu as pltpu


# --------------------------------------------------------------------------
# Kernel: all encoder layers fused.  grid = (batch_blocks, layers), layer axis
# innermost ("arbitrary").  The residual stream stays resident in the output
# VMEM block across the whole layer sweep.
# --------------------------------------------------------------------------
def _encoder_kernel(
    x_ref,
    ln1_g_ref, ln1_b_ref,
    wqkv_ref, bqkv_ref,
    wo_ref, bo_ref,
    ln2_g_ref, ln2_b_ref,
    w1_ref, b1_ref, w2_ref, b2_ref,
    o_ref,
    *, heads: int,
):
    layer = pl.program_id(1)

    Bb, T, D = o_ref.shape
    dk = D // heads
    G = Bb * heads
    scale = 1.0 / (dk ** 0.5)

    # Load this batch block into the resident f32 output block on layer 0.
    @pl.when(layer == 0)
    def _():
        o_ref[...] = x_ref[...].astype(o_ref.dtype)

    x = o_ref[...].reshape(Bb * T, D)                       # (rows, D) f32

    def layernorm(v, g, b):
        mu = jnp.mean(v, axis=-1, keepdims=True)
        c = v - mu
        var = jnp.mean(c * c, axis=-1, keepdims=True)       # centered (PyTorch)
        return c * jax.lax.rsqrt(var + 1e-5) * g + b

    def split_heads(t):
        # (Bb*T, D) -> (Bb*heads, T, dk); head h takes channels [h*dk,(h+1)*dk)
        return (t.reshape(Bb, T, heads, dk)
                 .transpose(0, 2, 1, 3)
                 .reshape(G, T, dk))

    # ---------------- multi-head self-attention sublayer (pre-norm) --------
    xn = layernorm(x, ln1_g_ref[0], ln1_b_ref[0]).astype(jnp.bfloat16)
    qkv = jnp.dot(xn, wqkv_ref[0],
                  preferred_element_type=jnp.float32) + bqkv_ref[0]
    q = qkv[:, :D] * scale
    k = qkv[:, D:2 * D]
    v = qkv[:, 2 * D:]

    qh = split_heads(q).astype(jnp.bfloat16)
    kh = split_heads(k).astype(jnp.bfloat16)
    vh = split_heads(v).astype(jnp.bfloat16)

    s = jnp.einsum("gtd,gsd->gts", qh, kh,
                   preferred_element_type=jnp.float32)
    s = s - jnp.max(s, axis=-1, keepdims=True)
    p = jnp.exp(s)
    p = p * pl.reciprocal(jnp.sum(p, axis=-1, keepdims=True), approx=True)

    pv = jnp.einsum("gts,gsd->gtd", p.astype(jnp.bfloat16), vh,
                    preferred_element_type=jnp.float32)
    attn = (pv.reshape(Bb, heads, T, dk)
              .transpose(0, 2, 1, 3)
              .reshape(Bb * T, D))                           # concat over heads

    attn = jnp.dot(attn.astype(jnp.bfloat16), wo_ref[0],
                   preferred_element_type=jnp.float32) + bo_ref[0]
    x = x + attn                                             # residual

    # ---------------- feed-forward sublayer (pre-norm) ---------------------
    xn2 = layernorm(x, ln2_g_ref[0], ln2_b_ref[0]).astype(jnp.bfloat16)
    h1 = jnp.dot(xn2, w1_ref[0],
                 preferred_element_type=jnp.float32) + b1_ref[0]
    h1 = jnp.maximum(h1, 0.0).astype(jnp.bfloat16)           # ReLU
    ff = jnp.dot(h1, w2_ref[0],
                 preferred_element_type=jnp.float32) + b2_ref[0]
    x = x + ff                                               # residual

    # Residual stream stays resident; HBM DMA happens automatically only when
    # the output block index (batch block) changes.
    o_ref[...] = x.reshape(Bb, T, D)


# --------------------------------------------------------------------------
# Generation-aware sizing helpers.
# --------------------------------------------------------------------------
def _vmem_capacity_bytes():
    try:
        info = pltpu.get_tpu_info()
        for name in ("vmem_capacity_bytes", "vmem_size_bytes", "vmem_bytes"):
            v = getattr(info, name, None)
            if v:
                return int(v)
    except Exception:
        pass
    return 64 * 1024 * 1024          # conservative (v7x per-TC)


def _choose_batch_block(B, T, D, H, heads, act_budget_bytes):
    # Rough per-batch-row activation footprint of one fused layer body.
    per_b = (T * D * 4 * 10                 # residual, x block, q/k/v, pv, bf16 copies
             + heads * T * T * 8            # scores + probs (f32)
             + T * H * 6)                   # FFN hidden (f32 + bf16)
    fit = max(1, act_budget_bytes // max(per_b, 1))
    candidates = [d for d in range(1, B + 1) if B % d == 0 and d <= fit]
    bb = max(candidates) if candidates else 1
    # Prefer >= 2 batch blocks so the "parallel" axis can shard across
    # TensorCores (v7x megacore); harmless elsewhere at these sizes.
    if bb == B and B % 2 == 0 and (B // 2) <= fit:
        bb = B // 2
    return bb


# --------------------------------------------------------------------------
# Wrapper.
# --------------------------------------------------------------------------
def encoder_forward_pallas(x, kparams, heads, *, batch_block=None,
                           vmem_limit_bytes=None):
    """Encoder.forward with all layers fused into a single pallas_call.

    x: (B, T, D) float32.
    kparams: kernel-ready params (see prepare_encoder_params): per-layer
             weights stacked on a leading layer axis, (in, out) layout,
             matmul weights already in bf16, QKV fused.
    """
    B, T, D = x.shape
    L = kparams["wqkv"].shape[0]
    H = kparams["w1"].shape[-1]
    assert D % heads == 0, "inputs must be divisible by heads"

    vmem_cap = _vmem_capacity_bytes()
    if vmem_limit_bytes is None:
        # ~96 MiB on 128 MiB chips (v5e/v6e), ~48 MiB on 64 MiB chips (v7x).
        vmem_limit_bytes = int(min(vmem_cap * 3 // 4, 100 * 1024 * 1024))
    if batch_block is None:
        # bf16 weights, double-buffered, plus small f32 biases / LN params.
        weight_bytes = 4 * (4 * D * D + 2 * D * H) + 16 * (7 * D + H)
        act_budget = max(vmem_limit_bytes * 3 // 5 - weight_bytes, 1)
        batch_block = _choose_batch_block(B, T, D, H, heads, act_budget)
    assert B % batch_block == 0
    nb = B // batch_block

    x_spec = pl.BlockSpec((batch_block, T, D), lambda b, l: (b, 0, 0))

    def wspec(shape):
        # Per-layer weight slab; re-fetched only when the layer index changes.
        return pl.BlockSpec((1,) + shape, lambda b, l: (l, 0, 0))

    in_specs = [
        x_spec,
        wspec((1, D)), wspec((1, D)),            # ln1 gamma / beta
        wspec((D, 3 * D)), wspec((1, 3 * D)),    # fused Wqkv, bqkv
        wspec((D, D)), wspec((1, D)),            # Wo, bo
        wspec((1, D)), wspec((1, D)),            # ln2 gamma / beta
        wspec((D, H)), wspec((1, H)),            # W1, b1
        wspec((H, D)), wspec((1, D)),            # W2, b2
    ]

    kernel = functools.partial(_encoder_kernel, heads=heads)

    return pl.pallas_call(
        kernel,
        out_shape=jax.ShapeDtypeStruct((B, T, D), jnp.float32),
        grid_spec=pltpu.PrefetchScalarGridSpec(
            num_scalar_prefetch=0,
            grid=(nb, L),                         # layer axis innermost
            in_specs=in_specs,
            out_specs=x_spec,
        ),
        compiler_params=pltpu.CompilerParams(
            dimension_semantics=("parallel", "arbitrary"),
            vmem_limit_bytes=vmem_limit_bytes,
        ),
    )(
        x,
        kparams["ln1_g"], kparams["ln1_b"],
        kparams["wqkv"], kparams["bqkv"],
        kparams["wo"], kparams["bo"],
        kparams["ln2_g"], kparams["ln2_b"],
        kparams["w1"], kparams["b1"],
        kparams["w2"], kparams["b2"],
    )


# --------------------------------------------------------------------------
# Parameter construction / preparation.
# --------------------------------------------------------------------------
def make_encoder_params(key, layers, inputs, hidden):
    """Deterministic synthetic f32 parameters, stacked on a leading layer
    axis.  Weight matrices are stored (in, out) — already transposed relative
    to PyTorch nn.Linear's (out_features, in_features) storage."""
    L, D, H = layers, inputs, hidden
    ks = jax.random.split(key, 6)

    def w(k, shape):
        return 0.1 * jax.random.normal(k, (L,) + shape, jnp.float32)

    return {
        "ln1_g": jnp.ones((L, 1, D), jnp.float32),
        "ln1_b": jnp.zeros((L, 1, D), jnp.float32),
        "wq": w(ks[0], (D, D)), "bq": jnp.zeros((L, 1, D), jnp.float32),
        "wk": w(ks[1], (D, D)), "bk": jnp.zeros((L, 1, D), jnp.float32),
        "wv": w(ks[2], (D, D)), "bv": jnp.zeros((L, 1, D), jnp.float32),
        "wo": w(ks[3], (D, D)), "bo": jnp.zeros((L, 1, D), jnp.float32),
        "ln2_g": jnp.ones((L, 1, D), jnp.float32),
        "ln2_b": jnp.zeros((L, 1, D), jnp.float32),
        "w1": w(ks[4], (D, H)), "b1": jnp.zeros((L, 1, H), jnp.float32),
        "w2": w(ks[5], (H, D)), "b2": jnp.zeros((L, 1, D), jnp.float32),
    }


def prepare_encoder_params(raw):
    """One-time (load-time) prep: fuse Q/K/V and cast matmul weights to bf16
    so no per-call casting / concatenation happens in the forward wrapper."""
    bf16 = lambda w: w.astype(jnp.bfloat16)
    return {
        "ln1_g": raw["ln1_g"], "ln1_b": raw["ln1_b"],
        "wqkv": bf16(jnp.concatenate([raw["wq"], raw["wk"], raw["wv"]], -1)),
        "bqkv": jnp.concatenate([raw["bq"], raw["bk"], raw["bv"]], -1),
        "wo": bf16(raw["wo"]), "bo": raw["bo"],
        "ln2_g": raw["ln2_g"], "ln2_b": raw["ln2_b"],
        "w1": bf16(raw["w1"]), "b1": raw["b1"],
        "w2": bf16(raw["w2"]), "b2": raw["b2"],
    }


# --------------------------------------------------------------------------
# Pure-JAX reference (eval mode, mask=None) for tolerance checking.
# --------------------------------------------------------------------------
def encoder_reference(x, raw, heads):
    B, T, D = x.shape
    L = raw["wq"].shape[0]
    dk = D // heads

    def ln(v, g, b):
        mu = v.mean(-1, keepdims=True)
        var = ((v - mu) ** 2).mean(-1, keepdims=True)
        return (v - mu) / jnp.sqrt(var + 1e-5) * g + b

    # bf16-round the weight matrices so the comparison isolates kernel math.
    r = lambda w: w.astype(jnp.bfloat16).astype(jnp.float32)

    for l in range(L):
        y = ln(x, raw["ln1_g"][l][0], raw["ln1_b"][l][0])
        q = y @ r(raw["wq"][l]) + raw["bq"][l][0]
        k = y @ r(raw["wk"][l]) + raw["bk"][l][0]
        v = y @ r(raw["wv"][l]) + raw["bv"][l][0]
        sh = lambda t: t.reshape(B, T, heads, dk).transpose(0, 2, 1, 3)
        s = jnp.einsum("bhtd,bhsd->bhts", sh(q), sh(k)) / (dk ** 0.5)
        p = jax.nn.softmax(s, axis=-1)
        a = jnp.einsum("bhts,bhsd->bhtd", p, sh(v))
        a = a.transpose(0, 2, 1, 3).reshape(B, T, D)
        x = x + a @ r(raw["wo"][l]) + raw["bo"][l][0]
        y = ln(x, raw["ln2_g"][l][0], raw["ln2_b"][l][0])
        h1 = jnp.maximum(y @ r(raw["w1"][l]) + raw["b1"][l][0], 0.0)
        x = x + h1 @ r(raw["w2"][l]) + raw["b2"][l][0]
    return x


if __name__ == "__main__":
    # Small shapes consistent with the module: (batch, seq, inputs)
    LAYERS, INPUTS, HEADS, HIDDEN = 2, 32, 4, 64
    B, T = 2, 8

    key = jax.random.PRNGKey(0)
    kx, kp = jax.random.split(key)
    x = jax.random.normal(kx, (B, T, INPUTS), jnp.float32)

    raw_params = make_encoder_params(kp, LAYERS, INPUTS, HIDDEN)
    kparams = prepare_encoder_params(raw_params)

    out = encoder_forward_pallas(x, kparams, HEADS)
    jax.block_until_ready(out)

    assert out.shape == (B, T, INPUTS)
    assert bool(jnp.all(jnp.isfinite(out)))

    ref = encoder_reference(x, raw_params, HEADS)
    assert bool(jnp.allclose(out, ref, atol=5e-2, rtol=5e-2)), (
        "max abs err %f" % float(jnp.max(jnp.abs(out - ref))))

    print("KERNEL_OK")
</pallas_src>

<mosaic_0001>
module attributes {stable_mosaic.version = 11 : i64} {
  func.func @_encoder_kernel(%arg0: i32, %arg1: i32, %arg2: memref<1x8x32xf32, #tpu.memory_space<vmem>>, %arg3: memref<1x1x32xf32, #tpu.memory_space<vmem>>, %arg4: memref<1x1x32xf32, #tpu.memory_space<vmem>>, %arg5: memref<1x32x96xbf16, #tpu.memory_space<vmem>>, %arg6: memref<1x1x96xf32, #tpu.memory_space<vmem>>, %arg7: memref<1x32x32xbf16, #tpu.memory_space<vmem>>, %arg8: memref<1x1x32xf32, #tpu.memory_space<vmem>>, %arg9: memref<1x1x32xf32, #tpu.memory_space<vmem>>, %arg10: memref<1x1x32xf32, #tpu.memory_space<vmem>>, %arg11: memref<1x32x64xbf16, #tpu.memory_space<vmem>>, %arg12: memref<1x1x64xf32, #tpu.memory_space<vmem>>, %arg13: memref<1x64x32xbf16, #tpu.memory_space<vmem>>, %arg14: memref<1x1x32xf32, #tpu.memory_space<vmem>>, %arg15: memref<1x8x32xf32, #tpu.memory_space<vmem>>) attributes {dimension_semantics = [#tpu.dimension_semantics<parallel>, #tpu.dimension_semantics<arbitrary>], iteration_bounds = array<i64: 2, 2>, scalar_prefetch = 0 : i64, scratch_operands = 0 : i64, tpu.core_type = #tpu.core_type<tc>, window_params = [{transform_indices = @transform_0, window_bounds = array<i64: 1, 8, 32>}, {transform_indices = @transform_1, window_bounds = array<i64: 1, 1, 32>}, {transform_indices = @transform_2, window_bounds = array<i64: 1, 1, 32>}, {transform_indices = @transform_3, window_bounds = array<i64: 1, 32, 96>}, {transform_indices = @transform_4, window_bounds = array<i64: 1, 1, 96>}, {transform_indices = @transform_5, window_bounds = array<i64: 1, 32, 32>}, {transform_indices = @transform_6, window_bounds = array<i64: 1, 1, 32>}, {transform_indices = @transform_7, window_bounds = array<i64: 1, 1, 32>}, {transform_indices = @transform_8, window_bounds = array<i64: 1, 1, 32>}, {transform_indices = @transform_9, window_bounds = array<i64: 1, 32, 64>}, {transform_indices = @transform_10, window_bounds = array<i64: 1, 1, 64>}, {transform_indices = @transform_11, window_bounds = array<i64: 1, 64, 32>}, {transform_indices = @transform_12, window_bounds = array<i64: 1, 1, 32>}, {transform_indices = @transform_13, window_bounds = array<i64: 1, 8, 32>}]} {
    %c0_i32 = arith.constant 0 : i32
    %0 = arith.cmpi eq, %arg1, %c0_i32 : i32
    %1 = arith.extui %0 : i1 to i32
    %c0_i32_0 = arith.constant 0 : i32
    %2 = arith.cmpi ne, %1, %c0_i32_0 : i32
    scf.if %2 {
      %c0_61 = arith.constant 0 : index
      %c0_62 = arith.constant 0 : index
      %c0_63 = arith.constant 0 : index
      %124 = vector.load %arg2[%c0_61, %c0_62, %c0_63] : memref<1x8x32xf32, #tpu.memory_space<vmem>>, vector<1x8x32xf32>
      %c0_64 = arith.constant 0 : index
      %c0_65 = arith.constant 0 : index
      %c0_66 = arith.constant 0 : index
      %125 = vector.load %arg15[%c0_64, %c0_65, %c0_66] : memref<1x8x32xf32, #tpu.memory_space<vmem>>, vector<1x8x32xf32>
      tpu.vector_store %arg15[%c0_64, %c0_65, %c0_66], %124 {strides = array<i32>} : memref<1x8x32xf32, #tpu.memory_space<vmem>>, vector<1x8x32xf32>,
    } else {
    }
    %c0 = arith.constant 0 : index
    %c0_1 = arith.constant 0 : index
    %c0_2 = arith.constant 0 : index
    %3 = vector.load %arg15[%c0, %c0_1, %c0_2] : memref<1x8x32xf32, #tpu.memory_space<vmem>>, vector<1x8x32xf32>
    %4 = vector.shape_cast %3 : vector<1x8x32xf32> to vector<8x32xf32>
    %c0_3 = arith.constant 0 : index
    %c0_4 = arith.constant 0 : index
    %c0_5 = arith.constant 0 : index
    %5 = vector.load %arg3[%c0_3, %c0_4, %c0_5] : memref<1x1x32xf32, #tpu.memory_space<vmem>>, vector<1x1x32xf32>
    %6 = vector.shape_cast %5 : vector<1x1x32xf32> to vector<1x32xf32>
    %c0_6 = arith.constant 0 : index
    %c0_7 = arith.constant 0 : index
    %c0_8 = arith.constant 0 : index
    %7 = vector.load %arg4[%c0_6, %c0_7, %c0_8] : memref<1x1x32xf32, #tpu.memory_space<vmem>>, vector<1x1x32xf32>
    %8 = vector.shape_cast %7 : vector<1x1x32xf32> to vector<1x32xf32>
    %cst = arith.constant dense<0.000000e+00> : vector<8xf32>
    %9 = vector.multi_reduction <add>, %4, %cst [1] : vector<8x32xf32> to vector<8xf32>
    %10 = vector.shape_cast %9 : vector<8xf32> to vector<8x1xf32>
    %cst_9 = arith.constant 3.200000e+01 : f32
    %11 = vector.broadcast %cst_9 : f32 to vector<8x1xf32>
    %12 = arith.divf %10, %11 : vector<8x1xf32>
    %13 = vector.broadcast %12 : vector<8x1xf32> to vector<8x32xf32>
    %14 = arith.subf %4, %13 : vector<8x32xf32>
    %15 = arith.mulf %14, %14 : vector<8x32xf32>
    %cst_10 = arith.constant dense<0.000000e+00> : vector<8xf32>
    %16 = vector.multi_reduction <add>, %15, %cst_10 [1] : vector<8x32xf32> to vector<8xf32>
    %17 = vector.shape_cast %16 : vector<8xf32> to vector<8x1xf32>
    %cst_11 = arith.constant 3.200000e+01 : f32
    %18 = vector.broadcast %cst_11 : f32 to vector<8x1xf32>
    %19 = arith.divf %17, %18 : vector<8x1xf32>
    %cst_12 = arith.constant 9.99999974E-6 : f32
    %20 = vector.broadcast %cst_12 : f32 to vector<8x1xf32>
    %21 = arith.addf %19, %20 : vector<8x1xf32>
    %22 = math.rsqrt %21 : vector<8x1xf32>
    %23 = vector.broadcast %22 : vector<8x1xf32> to vector<8x32xf32>
    %24 = arith.mulf %14, %23 : vector<8x32xf32>
    %25 = vector.broadcast %6 : vector<1x32xf32> to vector<8x32xf32>
    %26 = arith.mulf %24, %25 : vector<8x32xf32>
    %27 = vector.broadcast %8 : vector<1x32xf32> to vector<8x32xf32>
    %28 = arith.addf %26, %27 : vector<8x32xf32>
    %29 = arith.truncf %28 : vector<8x32xf32> to vector<8x32xbf16>
    %c0_13 = arith.constant 0 : index
    %c0_14 = arith.constant 0 : index
    %c0_15 = arith.constant 0 : index
    %30 = vector.load %arg5[%c0_13, %c0_14, %c0_15] : memref<1x32x96xbf16, #tpu.memory_space<vmem>>, vector<1x32x96xbf16>
    %31 = vector.shape_cast %30 : vector<1x32x96xbf16> to vector<32x96xbf16>
    %cst_16 = arith.constant dense<0.000000e+00> : vector<8x96xf32>
    %32 = tpu.matmul %29, %31, %cst_16 {dimension_numbers = #tpu.dot_dimension_numbers<[1], [0], [0], [1], [0, 0, 1, 1], [], []>} : vector<8x32xbf16>, vector<32x96xbf16>, vector<8x96xf32> -> vector<8x96xf32>
    %c0_17 = arith.constant 0 : index
    %c0_18 = arith.constant 0 : index
    %c0_19 = arith.constant 0 : index
    %33 = vector.load %arg6[%c0_17, %c0_18, %c0_19] : memref<1x1x96xf32, #tpu.memory_space<vmem>>, vector<1x1x96xf32>
    %34 = vector.shape_cast %33 : vector<1x1x96xf32> to vector<1x96xf32>
    %35 = vector.broadcast %34 : vector<1x96xf32> to vector<8x96xf32>
    %36 = arith.addf %32, %35 : vector<8x96xf32>
    %37 = vector.extract_strided_slice %36 {offsets = [0, 0], sizes = [8, 32], strides = [1, 1]} : vector<8x96xf32> to vector<8x32xf32>
    %cst_20 = arith.constant 0.353553385 : f32
    %38 = vector.broadcast %cst_20 : f32 to vector<8x32xf32>
    %39 = arith.mulf %37, %38 : vector<8x32xf32>
    %40 = vector.extract_strided_slice %36 {offsets = [0, 32], sizes = [8, 32], strides = [1, 1]} : vector<8x96xf32> to vector<8x32xf32>
    %41 = vector.extract_strided_slice %36 {offsets = [0, 64], sizes = [8, 32], strides = [1, 1]} : vector<8x96xf32> to vector<8x32xf32>
    %42 = vector.shape_cast %39 : vector<8x32xf32> to vector<1x8x4x8xf32>
    %43 = tpu.transpose %42, [0, 2, 1, 3] : vector<1x8x4x8xf32> -> vector<1x4x8x8xf32>
    %44 = vector.shape_cast %43 : vector<1x4x8x8xf32> to vector<4x8x8xf32>
    %45 = arith.truncf %44 : vector<4x8x8xf32> to vector<4x8x8xbf16>
    %46 = vector.shape_cast %40 : vector<8x32xf32> to vector<1x8x4x8xf32>
    %47 = tpu.transpose %46, [0, 2, 1, 3] : vector<1x8x4x8xf32> -> vector<1x4x8x8xf32>
    %48 = vector.shape_cast %47 : vector<1x4x8x8xf32> to vector<4x8x8xf32>
    %49 = arith.truncf %48 : vector<4x8x8xf32> to vector<4x8x8xbf16>
    %50 = vector.shape_cast %41 : vector<8x32xf32> to vector<1x8x4x8xf32>
    %51 = tpu.transpose %50, [0, 2, 1, 3] : vector<1x8x4x8xf32> -> vector<1x4x8x8xf32>
    %52 = vector.shape_cast %51 : vector<1x4x8x8xf32> to vector<4x8x8xf32>
    %53 = arith.truncf %52 : vector<4x8x8xf32> to vector<4x8x8xbf16>
    "tpu.trace_start"() <{level = 10 : i32, message = "gtd,gsd->gts"}> : () -> ()
    %cst_21 = arith.constant dense<0.000000e+00> : vector<4x8x8xf32>
    %54 = tpu.matmul %45, %49, %cst_21 {dimension_numbers = #tpu.dot_dimension_numbers<[2], [2], [1], [1], [0, 0, 0, 1, 1, 1], [0], [0]>} : vector<4x8x8xbf16>, vector<4x8x8xbf16>, vector<4x8x8xf32> -> vector<4x8x8xf32>
    "tpu.trace_stop"() : () -> ()
    %cst_22 = arith.constant dense<0xFF800000> : vector<4x8xf32>
    %55 = vector.multi_reduction <maximumf>, %54, %cst_22 [2] : vector<4x8x8xf32> to vector<4x8xf32>
    %56 = vector.shape_cast %55 : vector<4x8xf32> to vector<4x8x1xf32>
    %57 = vector.broadcast %56 : vector<4x8x1xf32> to vector<4x8x8xf32>
    %58 = arith.subf %54, %57 : vector<4x8x8xf32>
    %59 = math.exp %58 : vector<4x8x8xf32>
    %cst_23 = arith.constant dense<0.000000e+00> : vector<4x8xf32>
    %60 = vector.multi_reduction <add>, %59, %cst_23 [2] : vector<4x8x8xf32> to vector<4x8xf32>
    %61 = vector.shape_cast %60 : vector<4x8xf32> to vector<4x8x1xf32>
    %62 = tpu.reciprocal %61 {approx = true} : vector<4x8x1xf32> -> vector<4x8x1xf32>
    %63 = vector.broadcast %62 : vector<4x8x1xf32> to vector<4x8x8xf32>
    %64 = arith.mulf %59, %63 : vector<4x8x8xf32>
    %65 = arith.truncf %64 : vector<4x8x8xf32> to vector<4x8x8xbf16>
    "tpu.trace_start"() <{level = 10 : i32, message = "gts,gsd->gtd"}> : () -> ()
    %cst_24 = arith.constant dense<0.000000e+00> : vector<4x8x8xf32>
    %66 = tpu.matmul %65, %53, %cst_24 {dimension_numbers = #tpu.dot_dimension_numbers<[2], [1], [1], [2], [0, 0, 0, 1, 1, 2], [0], [0]>} : vector<4x8x8xbf16>, vector<4x8x8xbf16>, vector<4x8x8xf32> -> vector<4x8x8xf32>
    "tpu.trace_stop"() : () -> ()
    %67 = vector.shape_cast %66 : vector<4x8x8xf32> to vector<1x4x8x8xf32>
    %68 = tpu.transpose %67, [0, 2, 1, 3] : vector<1x4x8x8xf32> -> vector<1x8x4x8xf32>
    %69 = vector.shape_cast %68 : vector<1x8x4x8xf32> to vector<8x32xf32>
    %70 = arith.truncf %69 : vector<8x32xf32> to vector<8x32xbf16>
    %c0_25 = arith.constant 0 : index
    %c0_26 = arith.constant 0 : index
    %c0_27 = arith.constant 0 : index
    %71 = vector.load %arg7[%c0_25, %c0_26, %c0_27] : memref<1x32x32xbf16, #tpu.memory_space<vmem>>, vector<1x32x32xbf16>
    %72 = vector.shape_cast %71 : vector<1x32x32xbf16> to vector<32x32xbf16>
    %cst_28 = arith.constant dense<0.000000e+00> : vector<8x32xf32>
    %73 = tpu.matmul %70, %72, %cst_28 {dimension_numbers = #tpu.dot_dimension_numbers<[1], [0], [0], [1], [0, 0, 1, 1], [], []>} : vector<8x32xbf16>, vector<32x32xbf16>, vector<8x32xf32> -> vector<8x32xf32>
    %c0_29 = arith.constant 0 : index
    %c0_30 = arith.constant 0 : index
    %c0_31 = arith.constant 0 : index
    %74 = vector.load %arg8[%c0_29, %c0_30, %c0_31] : memref<1x1x32xf32, #tpu.memory_space<vmem>>, vector<1x1x32xf32>
    %75 = vector.shape_cast %74 : vector<1x1x32xf32> to vector<1x32xf32>
    %76 = vector.broadcast %75 : vector<1x32xf32> to vector<8x32xf32>
    %77 = arith.addf %73, %76 : vector<8x32xf32>
    %78 = arith.addf %4, %77 : vector<8x32xf32>
    %c0_32 = arith.constant 0 : index
    %c0_33 = arith.constant 0 : index
    %c0_34 = arith.constant 0 : index
    %79 = vector.load %arg9[%c0_32, %c0_33, %c0_34] : memref<1x1x32xf32, #tpu.memory_space<vmem>>, vector<1x1x32xf32>
    %80 = vector.shape_cast %79 : vector<1x1x32xf32> to vector<1x32xf32>
    %c0_35 = arith.constant 0 : index
    %c0_36 = arith.constant 0 : index
    %c0_37 = arith.constant 0 : index
    %81 = vector.load %arg10[%c0_35, %c0_36, %c0_37] : memref<1x1x32xf32, #tpu.memory_space<vmem>>, vector<1x1x32xf32>
    %82 = vector.shape_cast %81 : vector<1x1x32xf32> to vector<1x32xf32>
    %cst_38 = arith.constant dense<0.000000e+00> : vector<8xf32>
    %83 = vector.multi_reduction <add>, %78, %cst_38 [1] : vector<8x32xf32> to vector<8xf32>
    %84 = vector.shape_cast %83 : vector<8xf32> to vector<8x1xf32>
    %cst_39 = arith.constant 3.200000e+01 : f32
    %85 = vector.broadcast %cst_39 : f32 to vector<8x1xf32>
    %86 = arith.divf %84, %85 : vector<8x1xf32>
    %87 = vector.broadcast %86 : vector<8x1xf32> to vector<8x32xf32>
    %88 = arith.subf %78, %87 : vector<8x32xf32>
    %89 = arith.mulf %88, %88 : vector<8x32xf32>
    %cst_40 = arith.constant dense<0.000000e+00> : vector<8xf32>
    %90 = vector.multi_reduction <add>, %89, %cst_40 [1] : vector<8x32xf32> to vector<8xf32>
    %91 = vector.shape_cast %90 : vector<8xf32> to vector<8x1xf32>
    %cst_41 = arith.constant 3.200000e+01 : f32
    %92 = vector.broadcast %cst_41 : f32 to vector<8x1xf32>
    %93 = arith.divf %91, %92 : vector<8x1xf32>
    %cst_42 = arith.constant 9.99999974E-6 : f32
    %94 = vector.broadcast %cst_42 : f32 to vector<8x1xf32>
    %95 = arith.addf %93, %94 : vector<8x1xf32>
    %96 = math.rsqrt %95 : vector<8x1xf32>
    %97 = vector.broadcast %96 : vector<8x1xf32> to vector<8x32xf32>
    %98 = arith.mulf %88, %97 : vector<8x32xf32>
    %99 = vector.broadcast %80 : vector<1x32xf32> to vector<8x32xf32>
    %100 = arith.mulf %98, %99 : vector<8x32xf32>
    %101 = vector.broadcast %82 : vector<1x32xf32> to vector<8x32xf32>
    %102 = arith.addf %100, %101 : vector<8x32xf32>
    %103 = arith.truncf %102 : vector<8x32xf32> to vector<8x32xbf16>
    %c0_43 = arith.constant 0 : index
    %c0_44 = arith.constant 0 : index
    %c0_45 = arith.constant 0 : index
    %104 = vector.load %arg11[%c0_43, %c0_44, %c0_45] : memref<1x32x64xbf16, #tpu.memory_space<vmem>>, vector<1x32x64xbf16>
    %105 = vector.shape_cast %104 : vector<1x32x64xbf16> to vector<32x64xbf16>
    %cst_46 = arith.constant dense<0.000000e+00> : vector<8x64xf32>
    %106 = tpu.matmul %103, %105, %cst_46 {dimension_numbers = #tpu.dot_dimension_numbers<[1], [0], [0], [1], [0, 0, 1, 1], [], []>} : vector<8x32xbf16>, vector<32x64xbf16>, vector<8x64xf32> -> vector<8x64xf32>
    %c0_47 = arith.constant 0 : index
    %c0_48 = arith.constant 0 : index
    %c0_49 = arith.constant 0 : index
    %107 = vector.load %arg12[%c0_47, %c0_48, %c0_49] : memref<1x1x64xf32, #tpu.memory_space<vmem>>, vector<1x1x64xf32>
    %108 = vector.shape_cast %107 : vector<1x1x64xf32> to vector<1x64xf32>
    %109 = vector.broadcast %108 : vector<1x64xf32> to vector<8x64xf32>
    %110 = arith.addf %106, %109 : vector<8x64xf32>
    %cst_50 = arith.constant 0.000000e+00 : f32
    %111 = vector.broadcast %cst_50 : f32 to vector<8x64xf32>
    %112 = arith.maximumf %110, %111 : vector<8x64xf32>
    %113 = arith.truncf %112 : vector<8x64xf32> to vector<8x64xbf16>
    %c0_51 = arith.constant 0 : index
    %c0_52 = arith.constant 0 : index
    %c0_53 = arith.constant 0 : index
    %114 = vector.load %arg13[%c0_51, %c0_52, %c0_53] : memref<1x64x32xbf16, #tpu.memory_space<vmem>>, vector<1x64x32xbf16>
    %115 = vector.shape_cast %114 : vector<1x64x32xbf16> to vector<64x32xbf16>
    %cst_54 = arith.constant dense<0.000000e+00> : vector<8x32xf32>
    %116 = tpu.matmul %113, %115, %cst_54 {dimension_numbers = #tpu.dot_dimension_numbers<[1], [0], [0], [1], [0, 0, 1, 1], [], []>} : vector<8x64xbf16>, vector<64x32xbf16>, vector<8x32xf32> -> vector<8x32xf32>
    %c0_55 = arith.constant 0 : index
    %c0_56 = arith.constant 0 : index
    %c0_57 = arith.constant 0 : index
    %117 = vector.load %arg14[%c0_55, %c0_56, %c0_57] : memref<1x1x32xf32, #tpu.memory_space<vmem>>, vector<1x1x32xf32>
    %118 = vector.shape_cast %117 : vector<1x1x32xf32> to vector<1x32xf32>
    %119 = vector.broadcast %118 : vector<1x32xf32> to vector<8x32xf32>
    %120 = arith.addf %116, %119 : vector<8x32xf32>
    %121 = arith.addf %78, %120 : vector<8x32xf32>
    %122 = vector.shape_cast %121 : vector<8x32xf32> to vector<1x8x32xf32>
    %c0_58 = arith.constant 0 : index
    %c0_59 = arith.constant 0 : index
    %c0_60 = arith.constant 0 : index
    %123 = vector.load %arg15[%c0_58, %c0_59, %c0_60] : memref<1x8x32xf32, #tpu.memory_space<vmem>>, vector<1x8x32xf32>
    tpu.vector_store %arg15[%c0_58, %c0_59, %c0_60], %122 {strides = array<i32>} : memref<1x8x32xf32, #tpu.memory_space<vmem>>, vector<1x8x32xf32>,
    return
  }
  func.func @transform_0(%arg0: i32, %arg1: i32) -> (i32, i32, i32) {
    %c0_i32 = arith.constant 0 : i32
    %c0_i32_0 = arith.constant 0 : i32
    %c0_i32_1 = arith.constant 0 : i32
    return %arg0, %c0_i32, %c0_i32_0 : i32, i32, i32
  }
  func.func @transform_1(%arg0: i32, %arg1: i32) -> (i32, i32, i32) {
    %c0_i32 = arith.constant 0 : i32
    %c0_i32_0 = arith.constant 0 : i32
    %c0_i32_1 = arith.constant 0 : i32
    return %arg1, %c0_i32, %c0_i32_0 : i32, i32, i32
  }
  func.func @transform_2(%arg0: i32, %arg1: i32) -> (i32, i32, i32) {
    %c0_i32 = arith.constant 0 : i32
    %c0_i32_0 = arith.constant 0 : i32
    %c0_i32_1 = arith.constant 0 : i32
    return %arg1, %c0_i32, %c0_i32_0 : i32, i32, i32
  }
  func.func @transform_3(%arg0: i32, %arg1: i32) -> (i32, i32, i32) {
    %c0_i32 = arith.constant 0 : i32
    %c0_i32_0 = arith.constant 0 : i32
    %c0_i32_1 = arith.constant 0 : i32
    return %arg1, %c0_i32, %c0_i32_0 : i32, i32, i32
  }
  func.func @transform_4(%arg0: i32, %arg1: i32) -> (i32, i32, i32) {
    %c0_i32 = arith.constant 0 : i32
    %c0_i32_0 = arith.constant 0 : i32
    %c0_i32_1 = arith.constant 0 : i32
    return %arg1, %c0_i32, %c0_i32_0 : i32, i32, i32
  }
  func.func @transform_5(%arg0: i32, %arg1: i32) -> (i32, i32, i32) {
    %c0_i32 = arith.constant 0 : i32
    %c0_i32_0 = arith.constant 0 : i32
    %c0_i32_1 = arith.constant 0 : i32
    return %arg1, %c0_i32, %c0_i32_0 : i32, i32, i32
  }
  func.func @transform_6(%arg0: i32, %arg1: i32) -> (i32, i32, i32) {
    %c0_i32 = arith.constant 0 : i32
    %c0_i32_0 = arith.constant 0 : i32
    %c0_i32_1 = arith.constant 0 : i32
    return %arg1, %c0_i32, %c0_i32_0 : i32, i32, i32
  }
  func.func @transform_7(%arg0: i32, %arg1: i32) -> (i32, i32, i32) {
    %c0_i32 = arith.constant 0 : i32
    %c0_i32_0 = arith.constant 0 : i32
    %c0_i32_1 = arith.constant 0 : i32
    return %arg1, %c0_i32, %c0_i32_0 : i32, i32, i32
  }
  func.func @transform_8(%arg0: i32, %arg1: i32) -> (i32, i32, i32) {
    %c0_i32 = arith.constant 0 : i32
    %c0_i32_0 = arith.constant 0 : i32
    %c0_i32_1 = arith.constant 0 : i32
    return %arg1, %c0_i32, %c0_i32_0 : i32, i32, i32
  }
  func.func @transform_9(%arg0: i32, %arg1: i32) -> (i32, i32, i32) {
    %c0_i32 = arith.constant 0 : i32
    %c0_i32_0 = arith.constant 0 : i32
    %c0_i32_1 = arith.constant 0 : i32
    return %arg1, %c0_i32, %c0_i32_0 : i32, i32, i32
  }
  func.func @transform_10(%arg0: i32, %arg1: i32) -> (i32, i32, i32) {
    %c0_i32 = arith.constant 0 : i32
    %c0_i32_0 = arith.constant 0 : i32
    %c0_i32_1 = arith.constant 0 : i32
    return %arg1, %c0_i32, %c0_i32_0 : i32, i32, i32
  }
  func.func @transform_11(%arg0: i32, %arg1: i32) -> (i32, i32, i32) {
    %c0_i32 = arith.constant 0 : i32
    %c0_i32_0 = arith.constant 0 : i32
    %c0_i32_1 = arith.constant 0 : i32
    return %arg1, %c0_i32, %c0_i32_0 : i32, i32, i32
  }
  func.func @transform_12(%arg0: i32, %arg1: i32) -> (i32, i32, i32) {
    %c0_i32 = arith.constant 0 : i32
    %c0_i32_0 = arith.constant 0 : i32
    %c0_i32_1 = arith.constant 0 : i32
    return %arg1, %c0_i32, %c0_i32_0 : i32, i32, i32
  }
  func.func @transform_13(%arg0: i32, %arg1: i32) -> (i32, i32, i32) {
    %c0_i32 = arith.constant 0 : i32
    %c0_i32_0 = arith.constant 0 : i32
    %c0_i32_1 = arith.constant 0 : i32
    return %arg0, %c0_i32, %c0_i32_0 : i32, i32, i32
  }
}

</mosaic_0001>

<llo_original>
// kernel: tpu_custom_call.1
$region0: #{tpu_custom_call.1}
  #allocation0 [shape = 'u32[]', space=smem, size = 0x4, offset = 0x4, fixed_abs, tag = 'smem constant byte address 0x4 - core index']
  #allocation1 [shape = 'u32[72,128]{1,0:T(1,128)}', space=vmem, size = 0x9000, scoped, tag = 'internal scratch']
  %s0 = inlined_call_operand.hbm [shape: f32[2,8,32], index: 0, kind: input, shape index: {}]
  %s1 = inlined_call_operand.hbm [shape: f32[2,1,32], index: 1, kind: input, shape index: {}]
  %s2 = inlined_call_operand.hbm [shape: f32[2,1,32], index: 2, kind: input, shape index: {}]
  %s3 = inlined_call_operand.vmem [shape: bf16[2,32,96], index: 3, kind: input, shape index: {}]
  %s4 = inlined_call_operand.vmem [shape: f32[2,1,96], index: 4, kind: input, shape index: {}]
  %s5 = inlined_call_operand.vmem [shape: bf16[2,32,32], index: 5, kind: input, shape index: {}]
  %s6 = inlined_call_operand.vmem [shape: f32[2,1,32], index: 6, kind: input, shape index: {}]
  %s7 = inlined_call_operand.hbm [shape: f32[2,1,32], index: 7, kind: input, shape index: {}]
  %s8 = inlined_call_operand.vmem [shape: f32[2,1,32], index: 8, kind: input, shape index: {}]
  %s9 = inlined_call_operand.vmem [shape: bf16[2,32,64], index: 9, kind: input, shape index: {}]
  %s10 = inlined_call_operand.vmem [shape: f32[2,1,64], index: 10, kind: input, shape index: {}]
  %s11 = inlined_call_operand.vmem [shape: bf16[2,64,32], index: 11, kind: input, shape index: {}]
  %s12 = inlined_call_operand.vmem [shape: f32[2,1,32], index: 12, kind: input, shape index: {}]
  %s13 = inlined_call_operand.hbm [shape: f32[2,8,32], index: 13, kind: output, shape index: {}]
  %s14 = sld [smem:[#allocation0]]
  $region105: #{tpu_custom_call.1} parent=0
    _
  %s16 = ssub.s32 1, %s14
  %s17 = scalar_select 0, %s16, %s14
  $region1: #{tpu_custom_call.1} parent=0
    #allocation2 [shape = 'u8[8192]{0}', space=vmem, size = 0x2000, scoped, tag = 'input window, operand 0']
    #allocation3 [shape = 's32[2]{0}', space=sflag, size = 0x8, scoped, tag = 'scoped memory for tpu_custom_call.1']
    #allocation4 [shape = 's32[2]{0}', space=sflag, size = 0x8, scoped, tag = 'scoped memory for tpu_custom_call.1']
    #allocation5 [shape = 'u8[1024]{0}', space=vmem, size = 0x400, scoped, tag = 'input window, operand 1']
    #allocation6 [shape = 's32[2]{0}', space=sflag, size = 0x8, scoped, tag = 'scoped memory for tpu_custom_call.1']
    #allocation7 [shape = 'u8[1024]{0}', space=vmem, size = 0x400, scoped, tag = 'input window, operand 2']
    #allocation8 [shape = 'u8[1024]{0}', space=vmem, size = 0x400, scoped, tag = 'input window, operand 7']
    #allocation9 [shape = 's32[2]{0}', space=sflag, size = 0x8, scoped, tag = 'scoped memory for tpu_custom_call.1']
    #allocation10 [shape = 'u8[8192]{0}', space=vmem, size = 0x2000, scoped, tag = 'output window, operand 0']
    %18 = vsyncpa [#allocation3], 0
    %s19 = scalar_lea.sflag [#allocation3], 1
    %20 = vsyncpa %s19, 0
    %21 = vsyncpa [#allocation6], 0
    %s22 = scalar_lea.sflag [#allocation6], 1
    %23 = vsyncpa %s22, 0
    %24 = vsyncpa [#allocation9], 0
    %s25 = scalar_lea.sflag [#allocation9], 1
    %26 = vsyncpa %s25, 0
    %27 = vsyncpa [#allocation4], 0
    %s28 = scalar_lea.sflag [#allocation4], 1
    %29 = vsyncpa %s28, 0
    loop: start=0, step=1, limit=6
    $region2: #{tpu_custom_call.1} parent=1 // loop_pre_header
      _
    $region3: #{tpu_custom_call.1} parent=1 // loop_header
      %s31 = sphi 0, %s35
      %p32 = scmp.ge.s32.totalorder %s31, 6
      %s38 = sphi 0, %s50
      %s39 = sphi 0, %s46
      %s40 = sphi 0, %s38
      %s41 = sphi 0, %s39
      %s42 = sphi 0, %s40
      %s43 = sphi 0, %s41
      %s53 = sphi 0, %s55
      %s56 = sphi 0, %s53
      %s57 = sphi 0, %s56
      %s73 = sphi 0, %s57
      %s79 = sphi 0, %s81
      %s82 = sphi 0, %s79
      %s83 = sphi 0, %s82
      %s99 = sphi 0, %s83
      %s105 = sphi 0, %s107
      %s108 = sphi 0, %s105
      %s109 = sphi 0, %s108
      %s125 = sphi 0, %s109
      %s131 = sphi 0, %s133
      %s134 = sphi 0, %s131
      %s135 = sphi 0, %s134
      %s151 = sphi 0, %s135
      %s157 = sphi 0, %s159
      %s160 = sphi 0, %s157
      %s161 = sphi 0, %s160
      %s177 = sphi 0, %s161
      %s183 = sphi 0, %s185
      %s186 = sphi 0, %s183
      %s187 = sphi 0, %s186
      %s203 = sphi 0, %s187
      %s209 = sphi 0, %s211
      %s212 = sphi 0, %s209
      %s213 = sphi 0, %s212
      %s229 = sphi 0, %s213
      %s235 = sphi 0, %s237
      %s238 = sphi 0, %s235
      %s239 = sphi 0, %s238
      %s255 = sphi 0, %s239
      %s261 = sphi 0, %s263
      %s264 = sphi 0, %s261
      %s265 = sphi 0, %s264
      %s281 = sphi 0, %s265
      %s287 = sphi 0, %s289
      %s290 = sphi 0, %s287
      %s291 = sphi 0, %s290
      %s307 = sphi 0, %s291
      %s313 = sphi 0, %s315
      %s316 = sphi 0, %s313
      %s317 = sphi 0, %s316
      %s333 = sphi 0, %s317
      %s339 = sphi 0, %s341
      %s342 = sphi 0, %s339
      %s343 = sphi 0, %s342
      %s359 = sphi 0, %s343
      %s365 = sphi 0, %s367
      %s368 = sphi 0, %s365
      %s369 = sphi 0, %s368
      %s385 = sphi 0, %s369
      %s391 = sphi 0, %s393
      %s394 = sphi 0, %s391
      %s395 = sphi 0, %s394
      %s411 = sphi 0, %s395
    $region4: #{tpu_custom_call.1} parent=1 // loop_header_branch
      %34 = sbr.rel (%p32) target = $region8
    $region5: #{tpu_custom_call.1} parent=1 // loop_body
      %s36 = ssub.s32 %s31, 1
      %s37 = ssub.s32 %s31, 2
      %s44 = sadd.s32 1, %s39
      %p45 = scmp.ge.s32.totalorder %s44, 2
      %s46 = scalar_select %p45, 0, %s44
      %s47 = sadd.s32 1, %s38
      %s48 = scalar_select %p45, %s47, %s38
      %p49 = scmp.ge.s32.totalorder %s48, 2
      %s50 = scalar_select %p49, 0, %s48
      %s51 = ssub.s32 %s38, %s50
      %p52 = scmp.eq.s32.totalorder %s51, 0
      %s54 = sadd.s32 %s53, 1
      %s55 = scalar_select %p52, %s53, %s54
      %p58 = pneg %p52
      %p59 = scmp.eq.s32.totalorder %s31, 3
      %p60 = por %p58, %p59
      %p61 = scmp.ne.s32.totalorder %s53, %s56
      %p62 = scmp.eq.s32.totalorder %s31, 0
      %p63 = por %p61, %p62
      %p64 = scmp.ne.s32.totalorder %s53, %s56
      %p65 = scmp.eq.s32.totalorder %s36, 3
      %p66 = por %p64, %p65
      %p67 = scmp.ne.s32.totalorder %s56, %s57
      %p68 = scmp.eq.s32.totalorder %s36, 0
      %p69 = por %p67, %p68
      %p70 = scmp.ne.s32.totalorder %s56, %s57
      %p71 = scmp.eq.s32.totalorder %s37, 3
      %p72 = por %p70, %p71
      %p74 = scmp.ne.s32.totalorder %s57, %s73
      %p75 = scmp.eq.s32.totalorder %s37, 0
      %p76 = por %p74, %p75
      %s77 = ssub.s32 %s39, %s46
      %p78 = scmp.eq.s32.totalorder %s77, 0
      %s80 = sadd.s32 %s79, 1
      %s81 = scalar_select %p78, %s79, %s80
      %p84 = pneg %p78
      %p85 = scmp.eq.s32.totalorder %s31, 3
      %p86 = por %p84, %p85
      %p87 = scmp.ne.s32.totalorder %s79, %s82
      %p88 = scmp.eq.s32.totalorder %s31, 0
      %p89 = por %p87, %p88
      %p90 = scmp.ne.s32.totalorder %s79, %s82
      %p91 = scmp.eq.s32.totalorder %s36, 3
      %p92 = por %p90, %p91
      %p93 = scmp.ne.s32.totalorder %s82, %s83
      %p94 = scmp.eq.s32.totalorder %s36, 0
      %p95 = por %p93, %p94
      %p96 = scmp.ne.s32.totalorder %s82, %s83
      %p97 = scmp.eq.s32.totalorder %s37, 3
      %p98 = por %p96, %p97
      %p100 = scmp.ne.s32.totalorder %s83, %s99
      %p101 = scmp.eq.s32.totalorder %s37, 0
      %p102 = por %p100, %p101
      %s103 = ssub.s32 %s39, %s46
      %p104 = scmp.eq.s32.totalorder %s103, 0
      %s106 = sadd.s32 %s105, 1
      %s107 = scalar_select %p104, %s105, %s106
      %p110 = pneg %p104
      %p111 = scmp.eq.s32.totalorder %s31, 3
      %p112 = por %p110, %p111
      %p113 = scmp.ne.s32.totalorder %s105, %s108
      %p114 = scmp.eq.s32.totalorder %s31, 0
      %p115 = por %p113, %p114
      %p116 = scmp.ne.s32.totalorder %s105, %s108
      %p117 = scmp.eq.s32.totalorder %s36, 3
      %p118 = por %p116, %p117
      %p119 = scmp.ne.s32.totalorder %s108, %s109
      %p120 = scmp.eq.s32.totalorder %s36, 0
      %p121 = por %p119, %p120
      %p122 = scmp.ne.s32.totalorder %s108, %s109
      %p123 = scmp.eq.s32.totalorder %s37, 3
      %p124 = por %p122, %p123
      %p126 = scmp.ne.s32.totalorder %s109, %s125
      %p127 = scmp.eq.s32.totalorder %s37, 0
      %p128 = por %p126, %p127
      %s129 = ssub.s32 %s39, %s46
      %p130 = scmp.eq.s32.totalorder %s129, 0
      %s132 = sadd.s32 %s131, 1
      %s133 = scalar_select %p130, %s131, %s132
      %p136 = pneg %p130
      %p137 = scmp.eq.s32.totalorder %s31, 3
      %p138 = por %p136, %p137
      %p139 = scmp.ne.s32.totalorder %s131, %s134
      %p140 = scmp.eq.s32.totalorder %s31, 0
      %p141 = por %p139, %p140
      %p142 = scmp.ne.s32.totalorder %s131, %s134
      %p143 = scmp.eq.s32.totalorder %s36, 3
      %p144 = por %p142, %p143
      %p145 = scmp.ne.s32.totalorder %s134, %s135
      %p146 = scmp.eq.s32.totalorder %s36, 0
      %p147 = por %p145, %p146
      %p148 = scmp.ne.s32.totalorder %s134, %s135
      %p149 = scmp.eq.s32.totalorder %s37, 3
      %p150 = por %p148, %p149
      %p152 = scmp.ne.s32.totalorder %s135, %s151
      %p153 = scmp.eq.s32.totalorder %s37, 0
      %p154 = por %p152, %p153
      %s155 = ssub.s32 %s39, %s46
      %p156 = scmp.eq.s32.totalorder %s155, 0
      %s158 = sadd.s32 %s157, 1
      %s159 = scalar_select %p156, %s157, %s158
      %p162 = pneg %p156
      %p163 = scmp.eq.s32.totalorder %s31, 3
      %p164 = por %p162, %p163
      %p165 = scmp.ne.s32.totalorder %s157, %s160
      %p166 = scmp.eq.s32.totalorder %s31, 0
      %p167 = por %p165, %p166
      %p168 = scmp.ne.s32.totalorder %s157, %s160
      %p169 = scmp.eq.s32.totalorder %s36, 3
      %p170 = por %p168, %p169
      %p171 = scmp.ne.s32.totalorder %s160, %s161
      %p172 = scmp.eq.s32.totalorder %s36, 0
      %p173 = por %p171, %p172
      %p174 = scmp.ne.s32.totalorder %s160, %s161
      %p175 = scmp.eq.s32.totalorder %s37, 3
      %p176 = por %p174, %p175
      %p178 = scmp.ne.s32.totalorder %s161, %s177
      %p179 = scmp.eq.s32.totalorder %s37, 0
      %p180 = por %p178, %p179
      %s181 = ssub.s32 %s39, %s46
      %p182 = scmp.eq.s32.totalorder %s181, 0
      %s184 = sadd.s32 %s183, 1
      %s185 = scalar_select %p182, %s183, %s184
      %p188 = pneg %p182
      %p189 = scmp.eq.s32.totalorder %s31, 3
      %p190 = por %p188, %p189
      %p191 = scmp.ne.s32.totalorder %s183, %s186
      %p192 = scmp.eq.s32.totalorder %s31, 0
      %p193 = por %p191, %p192
      %p194 = scmp.ne.s32.totalorder %s183, %s186
      %p195 = scmp.eq.s32.totalorder %s36, 3
      %p196 = por %p194, %p195
      %p197 = scmp.ne.s32.totalorder %s186, %s187
      %p198 = scmp.eq.s32.totalorder %s36, 0
      %p199 = por %p197, %p198
      %p200 = scmp.ne.s32.totalorder %s186, %s187
      %p201 = scmp.eq.s32.totalorder %s37, 3
      %p202 = por %p200, %p201
      %p204 = scmp.ne.s32.totalorder %s187, %s203
      %p205 = scmp.eq.s32.totalorder %s37, 0
      %p206 = por %p204, %p205
      %s207 = ssub.s32 %s39, %s46
      %p208 = scmp.eq.s32.totalorder %s207, 0
      %s210 = sadd.s32 %s209, 1
      %s211 = scalar_select %p208, %s209, %s210
      %p214 = pneg %p208
      %p215 = scmp.eq.s32.totalorder %s31, 3
      %p216 = por %p214, %p215
      %p217 = scmp.ne.s32.totalorder %s209, %s212
      %p218 = scmp.eq.s32.totalorder %s31, 0
      %p219 = por %p217, %p218
      %p220 = scmp.ne.s32.totalorder %s209, %s212
      %p221 = scmp.eq.s32.totalorder %s36, 3
      %p222 = por %p220, %p221
      %p223 = scmp.ne.s32.totalorder %s212, %s213
      %p224 = scmp.eq.s32.totalorder %s36, 0
      %p225 = por %p223, %p224
      %p226 = scmp.ne.s32.totalorder %s212, %s213
      %p227 = scmp.eq.s32.totalorder %s37, 3
      %p228 = por %p226, %p227
      %p230 = scmp.ne.s32.totalorder %s213, %s229
      %p231 = scmp.eq.s32.totalorder %s37, 0
      %p232 = por %p230, %p231
      %s233 = ssub.s32 %s39, %s46
      %p234 = scmp.eq.s32.totalorder %s233, 0
      %s236 = sadd.s32 %s235, 1
      %s237 = scalar_select %p234, %s235, %s236
      %p240 = pneg %p234
      %p241 = scmp.eq.s32.totalorder %s31, 3
      %p242 = por %p240, %p241
      %p243 = scmp.ne.s32.totalorder %s235, %s238
      %p244 = scmp.eq.s32.totalorder %s31, 0
      %p245 = por %p243, %p244
      %p246 = scmp.ne.s32.totalorder %s235, %s238
      %p247 = scmp.eq.s32.totalorder %s36, 3
      %p248 = por %p246, %p247
      %p249 = scmp.ne.s32.totalorder %s238, %s239
      %p250 = scmp.eq.s32.totalorder %s36, 0
      %p251 = por %p249, %p250
      %p252 = scmp.ne.s32.totalorder %s238, %s239
      %p253 = scmp.eq.s32.totalorder %s37, 3
      %p254 = por %p252, %p253
      %p256 = scmp.ne.s32.totalorder %s239, %s255
      %p257 = scmp.eq.s32.totalorder %s37, 0
      %p258 = por %p256, %p257
      %s259 = ssub.s32 %s39, %s46
      %p260 = scmp.eq.s32.totalorder %s259, 0
      %s262 = sadd.s32 %s261, 1
      %s263 = scalar_select %p260, %s261, %s262
      %p266 = pneg %p260
      %p267 = scmp.eq.s32.totalorder %s31, 3
      %p268 = por %p266, %p267
      %p269 = scmp.ne.s32.totalorder %s261, %s264
      %p270 = scmp.eq.s32.totalorder %s31, 0
      %p271 = por %p269, %p270
      %p272 = scmp.ne.s32.totalorder %s261, %s264
      %p273 = scmp.eq.s32.totalorder %s36, 3
      %p274 = por %p272, %p273
      %p275 = scmp.ne.s32.totalorder %s264, %s265
      %p276 = scmp.eq.s32.totalorder %s36, 0
      %p277 = por %p275, %p276
      %p278 = scmp.ne.s32.totalorder %s264, %s265
      %p279 = scmp.eq.s32.totalorder %s37, 3
      %p280 = por %p278, %p279
      %p282 = scmp.ne.s32.totalorder %s265, %s281
      %p283 = scmp.eq.s32.totalorder %s37, 0
      %p284 = por %p282, %p283
      %s285 = ssub.s32 %s39, %s46
      %p286 = scmp.eq.s32.totalorder %s285, 0
      %s288 = sadd.s32 %s287, 1
      %s289 = scalar_select %p286, %s287, %s288
      %p292 = pneg %p286
      %p293 = scmp.eq.s32.totalorder %s31, 3
      %p294 = por %p292, %p293
      %p295 = scmp.ne.s32.totalorder %s287, %s290
      %p296 = scmp.eq.s32.totalorder %s31, 0
      %p297 = por %p295, %p296
      %p298 = scmp.ne.s32.totalorder %s287, %s290
      %p299 = scmp.eq.s32.totalorder %s36, 3
      %p300 = por %p298, %p299
      %p301 = scmp.ne.s32.totalorder %s290, %s291
      %p302 = scmp.eq.s32.totalorder %s36, 0
      %p303 = por %p301, %p302
      %p304 = scmp.ne.s32.totalorder %s290, %s291
      %p305 = scmp.eq.s32.totalorder %s37, 3
      %p306 = por %p304, %p305
      %p308 = scmp.ne.s32.totalorder %s291, %s307
      %p309 = scmp.eq.s32.totalorder %s37, 0
      %p310 = por %p308, %p309
      %s311 = ssub.s32 %s39, %s46
      %p312 = scmp.eq.s32.totalorder %s311, 0
      %s314 = sadd.s32 %s313, 1
      %s315 = scalar_select %p312, %s313, %s314
      %p318 = pneg %p312
      %p319 = scmp.eq.s32.totalorder %s31, 3
      %p320 = por %p318, %p319
      %p321 = scmp.ne.s32.totalorder %s313, %s316
      %p322 = scmp.eq.s32.totalorder %s31, 0
      %p323 = por %p321, %p322
      %p324 = scmp.ne.s32.totalorder %s313, %s316
      %p325 = scmp.eq.s32.totalorder %s36, 3
      %p326 = por %p324, %p325
      %p327 = scmp.ne.s32.totalorder %s316, %s317
      %p328 = scmp.eq.s32.totalorder %s36, 0
      %p329 = por %p327, %p328
      %p330 = scmp.ne.s32.totalorder %s316, %s317
      %p331 = scmp.eq.s32.totalorder %s37, 3
      %p332 = por %p330, %p331
      %p334 = scmp.ne.s32.totalorder %s317, %s333
      %p335 = scmp.eq.s32.totalorder %s37, 0
      %p336 = por %p334, %p335
      %s337 = ssub.s32 %s39, %s46
      %p338 = scmp.eq.s32.totalorder %s337, 0
      %s340 = sadd.s32 %s339, 1
      %s341 = scalar_select %p338, %s339, %s340
      %p344 = pneg %p338
      %p345 = scmp.eq.s32.totalorder %s31, 3
      %p346 = por %p344, %p345
      %p347 = scmp.ne.s32.totalorder %s339, %s342
      %p348 = scmp.eq.s32.totalorder %s31, 0
      %p349 = por %p347, %p348
      %p350 = scmp.ne.s32.totalorder %s339, %s342
      %p351 = scmp.eq.s32.totalorder %s36, 3
      %p352 = por %p350, %p351
      %p353 = scmp.ne.s32.totalorder %s342, %s343
      %p354 = scmp.eq.s32.totalorder %s36, 0
      %p355 = por %p353, %p354
      %p356 = scmp.ne.s32.totalorder %s342, %s343
      %p357 = scmp.eq.s32.totalorder %s37, 3
      %p358 = por %p356, %p357
      %p360 = scmp.ne.s32.totalorder %s343, %s359
      %p361 = scmp.eq.s32.totalorder %s37, 0
      %p362 = por %p360, %p361
      %s363 = ssub.s32 %s39, %s46
      %p364 = scmp.eq.s32.totalorder %s363, 0
      %s366 = sadd.s32 %s365, 1
      %s367 = scalar_select %p364, %s365, %s366
      %p370 = pneg %p364
      %p371 = scmp.eq.s32.totalorder %s31, 3
      %p372 = por %p370, %p371
      %p373 = scmp.ne.s32.totalorder %s365, %s368
      %p374 = scmp.eq.s32.totalorder %s31, 0
      %p375 = por %p373, %p374
      %p376 = scmp.ne.s32.totalorder %s365, %s368
      %p377 = scmp.eq.s32.totalorder %s36, 3
      %p378 = por %p376, %p377
      %p379 = scmp.ne.s32.totalorder %s368, %s369
      %p380 = scmp.eq.s32.totalorder %s36, 0
      %p381 = por %p379, %p380
      %p382 = scmp.ne.s32.totalorder %s368, %s369
      %p383 = scmp.eq.s32.totalorder %s37, 3
      %p384 = por %p382, %p383
      %p386 = scmp.ne.s32.totalorder %s369, %s385
      %p387 = scmp.eq.s32.totalorder %s37, 0
      %p388 = por %p386, %p387
      %s389 = ssub.s32 %s38, %s50
      %p390 = scmp.eq.s32.totalorder %s389, 0
      %s392 = sadd.s32 %s391, 1
      %s393 = scalar_select %p390, %s391, %s392
      %p396 = pneg %p390
      %p397 = scmp.eq.s32.totalorder %s31, 3
      %p398 = por %p396, %p397
      %p399 = scmp.ne.s32.totalorder %s391, %s394
      %p400 = scmp.eq.s32.totalorder %s31, 0
      %p401 = por %p399, %p400
      %p402 = scmp.ne.s32.totalorder %s391, %s394
      %p403 = scmp.eq.s32.totalorder %s36, 3
      %p404 = por %p402, %p403
      %p405 = scmp.ne.s32.totalorder %s394, %s395
      %p406 = scmp.eq.s32.totalorder %s36, 0
      %p407 = por %p405, %p406
      %p408 = scmp.ne.s32.totalorder %s394, %s395
      %p409 = scmp.eq.s32.totalorder %s37, 3
      %p410 = por %p408, %p409
      %p412 = scmp.ne.s32.totalorder %s395, %s411
      %p413 = scmp.eq.s32.totalorder %s37, 0
      %p414 = por %p412, %p413
      %p415 = scmp.le.s32.totalorder 1, %s31
      %p416 = scmp.lt.s32.totalorder %s31, 5
      %p417 = pnand %p415, %p416
      %p418 = pneg %p417
      // Predicated region
      $region9: #{tpu_custom_call.1} parent=5 // pred_check
        _
      $region10: #{tpu_custom_call.1} parent=5 // pred_check_branch
        %420 = sbr.rel (%p417) target = $region12
      $region11: #{tpu_custom_call.1} parent=5 // pred_region
        %s421 = ssub.s32 %s31, 1
      $region12: #{tpu_custom_call.1} parent=5 // pred_fallthru
        _
      %p422 = scmp.lt.s32.totalorder %s31, 4
      // Predicated region
      $region13: #{tpu_custom_call.1} parent=5 // pred_check
        %p423 = pneg %p422
      $region14: #{tpu_custom_call.1} parent=5 // pred_check_branch
        %425 = sbr.rel (%p423) target = $region16
      $region15: #{tpu_custom_call.1} parent=5 // pred_region
        // Predicated region
        $region17: #{tpu_custom_call.1} parent=15 // pred_check
          %p426 = pneg %p63
        $region18: #{tpu_custom_call.1} parent=15 // pred_check_branch
          %428 = sbr.rel (%p426) target = $region20
        $region19: #{tpu_custom_call.1} parent=15 // pred_region
          %s429 = sand.u32 %s53, 1
          %s430 = scalar_lea.sflag [#allocation3], %s429
          %s431 = sand.u32 %s53, 1
          %s432 = smul.addr %s431, 8
          %s433 = scalar_lea.vmem [#allocation2], %s432
          %435 = vsyncadd %s430, 0
          %s436 = smul.addr %s38, 8
          %s437 = scalar_lea.hbm %s0, %s436
          %s439 = sshll.u32 %s437, 4
          %s440 = int_to_ptr.hbm [resolvable:$true] %s439
          %s441 = sshll.u32 %s433, 4
          %s442 = int_to_ptr.vmem [resolvable:$true] %s441
          %444 = dma.hbm_to_vmem [thread:$0]  %s440, 128, %s442, %s430
        $region20: #{tpu_custom_call.1} parent=15 // pred_fallthru
          _
        // Predicated region
        $region21: #{tpu_custom_call.1} parent=15 // pred_check
          %p445 = pneg %p89
        $region22: #{tpu_custom_call.1} parent=15 // pred_check_branch
          %447 = sbr.rel (%p445) target = $region24
        $region23: #{tpu_custom_call.1} parent=15 // pred_region
          %s448 = sand.u32 %s31, 1
          %s449 = scalar_lea.sflag [#allocation6], %s448
          %s450 = sand.u32 %s79, 1
          %s451 = scalar_lea.vmem [#allocation5], %s450
          %453 = vsyncadd %s449, 0
          %s454 = scalar_lea.hbm %s1, %s39
          %s456 = sshll.u32 %s454, 4
          %s457 = int_to_ptr.hbm [resolvable:$true] %s456
          %s458 = sshll.u32 %s451, 4
          %s459 = int_to_ptr.vmem [resolvable:$true] %s458
          %461 = dma.hbm_to_vmem [thread:$0]  %s457, 16, %s459, %s449
        $region24: #{tpu_custom_call.1} parent=15 // pred_fallthru
          _
        // Predicated region
        $region25: #{tpu_custom_call.1} parent=15 // pred_check
          %p462 = pneg %p115
        $region26: #{tpu_custom_call.1} parent=15 // pred_check_branch
          %464 = sbr.rel (%p462) target = $region28
        $region27: #{tpu_custom_call.1} parent=15 // pred_region
          %s465 = sand.u32 %s31, 1
          %s466 = scalar_lea.sflag [#allocation6], %s465
          %s467 = sand.u32 %s105, 1
          %s468 = scalar_lea.vmem [#allocation7], %s467
          %470 = vsyncadd %s466, 0
          %s471 = scalar_lea.hbm %s2, %s39
          %s473 = sshll.u32 %s471, 4
          %s474 = int_to_ptr.hbm [resolvable:$true] %s473
          %s475 = sshll.u32 %s468, 4
          %s476 = int_to_ptr.vmem [resolvable:$true] %s475
          %478 = dma.hbm_to_vmem [thread:$0]  %s474, 16, %s476, %s466
        $region28: #{tpu_custom_call.1} parent=15 // pred_fallthru
          _
        // Predicated region
        $region29: #{tpu_custom_call.1} parent=15 // pred_check
          %p479 = pneg %p141
        $region30: #{tpu_custom_call.1} parent=15 // pred_check_branch
          %481 = sbr.rel (%p479) target = $region32
        $region31: #{tpu_custom_call.1} parent=15 // pred_region
          %p482 = scmp.lt.s32.totalorder %s39, 1
          %s483 = scalar_select %p482, %s39, 1
          %s484 = smul.addr %s483, 4
          %s485 = smul.addr %s484, 4
          %s486 = scalar_lea.vmem %s3, %s485
        $region32: #{tpu_custom_call.1} parent=15 // pred_fallthru
          _
        // Predicated region
        $region33: #{tpu_custom_call.1} parent=15 // pred_check
          %p487 = pneg %p167
        $region34: #{tpu_custom_call.1} parent=15 // pred_check_branch
          %489 = sbr.rel (%p487) target = $region36
        $region35: #{tpu_custom_call.1} parent=15 // pred_region
          %p490 = scmp.lt.s32.totalorder %s39, 1
          %s491 = scalar_select %p490, %s39, 1
          %s492 = scalar_lea.vmem %s4, %s491
        $region36: #{tpu_custom_call.1} parent=15 // pred_fallthru
          _
        // Predicated region
        $region37: #{tpu_custom_call.1} parent=15 // pred_check
          %p493 = pneg %p193
        $region38: #{tpu_custom_call.1} parent=15 // pred_check_branch
          %495 = sbr.rel (%p493) target = $region40
        $region39: #{tpu_custom_call.1} parent=15 // pred_region
          %p496 = scmp.lt.s32.totalorder %s39, 1
          %s497 = scalar_select %p496, %s39, 1
          %s498 = smul.addr %s497, 4
          %s499 = smul.addr %s498, 4
          %s500 = scalar_lea.vmem %s5, %s499
        $region40: #{tpu_custom_call.1} parent=15 // pred_fallthru
          _
        // Predicated region
        $region41: #{tpu_custom_call.1} parent=15 // pred_check
          %p501 = pneg %p219
        $region42: #{tpu_custom_call.1} parent=15 // pred_check_branch
          %503 = sbr.rel (%p501) target = $region44
        $region43: #{tpu_custom_call.1} parent=15 // pred_region
          %p504 = scmp.lt.s32.totalorder %s39, 1
          %s505 = scalar_select %p504, %s39, 1
          %s506 = scalar_lea.vmem %s6, %s505
        $region44: #{tpu_custom_call.1} parent=15 // pred_fallthru
          _
        // Predicated region
        $region45: #{tpu_custom_call.1} parent=15 // pred_check
          %p507 = pneg %p245
        $region46: #{tpu_custom_call.1} parent=15 // pred_check_branch
          %509 = sbr.rel (%p507) target = $region48
        $region47: #{tpu_custom_call.1} parent=15 // pred_region
          %s510 = sand.u32 %s235, 1
          %s511 = scalar_lea.sflag [#allocation9], %s510
          %s512 = sand.u32 %s235, 1
          %s513 = scalar_lea.vmem [#allocation8], %s512
          %515 = vsyncadd %s511, 0
          %s516 = scalar_lea.hbm %s7, %s39
          %s518 = sshll.u32 %s516, 4
          %s519 = int_to_ptr.hbm [resolvable:$true] %s518
          %s520 = sshll.u32 %s513, 4
          %s521 = int_to_ptr.vmem [resolvable:$true] %s520
          %523 = dma.hbm_to_vmem [thread:$0]  %s519, 16, %s521, %s511
        $region48: #{tpu_custom_call.1} parent=15 // pred_fallthru
          _
        // Predicated region
        $region49: #{tpu_custom_call.1} parent=15 // pred_check
          %p524 = pneg %p271
        $region50: #{tpu_custom_call.1} parent=15 // pred_check_branch
          %526 = sbr.rel (%p524) target = $region52
        $region51: #{tpu_custom_call.1} parent=15 // pred_region
          %p527 = scmp.lt.s32.totalorder %s39, 1
          %s528 = scalar_select %p527, %s39, 1
          %s529 = scalar_lea.vmem %s8, %s528
        $region52: #{tpu_custom_call.1} parent=15 // pred_fallthru
          _
        // Predicated region
        $region53: #{tpu_custom_call.1} parent=15 // pred_check
          %p530 = pneg %p297
        $region54: #{tpu_custom_call.1} parent=15 // pred_check_branch
          %532 = sbr.rel (%p530) target = $region56
        $region55: #{tpu_custom_call.1} parent=15 // pred_region
          %p533 = scmp.lt.s32.totalorder %s39, 1
          %s534 = scalar_select %p533, %s39, 1
          %s535 = smul.addr %s534, 4
          %s536 = smul.addr %s535, 4
          %s537 = scalar_lea.vmem %s9, %s536
        $region56: #{tpu_custom_call.1} parent=15 // pred_fallthru
          _
        // Predicated region
        $region57: #{tpu_custom_call.1} parent=15 // pred_check
          %p538 = pneg %p323
        $region58: #{tpu_custom_call.1} parent=15 // pred_check_branch
          %540 = sbr.rel (%p538) target = $region60
        $region59: #{tpu_custom_call.1} parent=15 // pred_region
          %p541 = scmp.lt.s32.totalorder %s39, 1
          %s542 = scalar_select %p541, %s39, 1
          %s543 = scalar_lea.vmem %s10, %s542
        $region60: #{tpu_custom_call.1} parent=15 // pred_fallthru
          _
        // Predicated region
        $region61: #{tpu_custom_call.1} parent=15 // pred_check
          %p544 = pneg %p349
        $region62: #{tpu_custom_call.1} parent=15 // pred_check_branch
          %546 = sbr.rel (%p544) target = $region64
        $region63: #{tpu_custom_call.1} parent=15 // pred_region
          %p547 = scmp.lt.s32.totalorder %s39, 1
          %s548 = scalar_select %p547, %s39, 1
          %s549 = smul.addr %s548, 8
          %s550 = smul.addr %s549, 4
          %s551 = scalar_lea.vmem %s11, %s550
        $region64: #{tpu_custom_call.1} parent=15 // pred_fallthru
          _
        // Predicated region
        $region65: #{tpu_custom_call.1} parent=15 // pred_check
          %p552 = pneg %p375
        $region66: #{tpu_custom_call.1} parent=15 // pred_check_branch
          %554 = sbr.rel (%p552) target = $region68
        $region67: #{tpu_custom_call.1} parent=15 // pred_region
          %p555 = scmp.lt.s32.totalorder %s39, 1
          %s556 = scalar_select %p555, %s39, 1
          %s557 = scalar_lea.vmem %s12, %s556
        $region68: #{tpu_custom_call.1} parent=15 // pred_fallthru
          _
      $region16: #{tpu_custom_call.1} parent=5 // pred_fallthru
        _
      %p558 = scmp.le.s32.totalorder 1, %s31
      %p559 = scmp.lt.s32.totalorder %s31, 5
      %p560 = pnand %p558, %p559
      %p561 = pneg %p560
      // Predicated region
      $region69: #{tpu_custom_call.1} parent=5 // pred_check
        _
      $region70: #{tpu_custom_call.1} parent=5 // pred_check_branch
        %563 = sbr.rel (%p560) target = $region72
      $region71: #{tpu_custom_call.1} parent=5 // pred_region
        %s564 = ssub.s32 %s31, 1
        %s565 = sand.u32 %s56, 1
        %s566 = scalar_lea.sflag [#allocation3], %s565
        %s567 = sand.u32 %s56, 1
        %s568 = smul.addr %s567, 8
        %s569 = scalar_lea.vmem [#allocation2], %s568
        // Predicated region
        $region73: #{tpu_custom_call.1} parent=71 // pred_check
          %p570 = pneg %p69
        $region74: #{tpu_custom_call.1} parent=71 // pred_check_branch
          %572 = sbr.rel (%p570) target = $region76
        $region75: #{tpu_custom_call.1} parent=71 // pred_region
          %574 = dma.done %s566, 128
        $region76: #{tpu_custom_call.1} parent=71 // pred_fallthru
          _
        %s575 = sand.u32 %s36, 1
        %s576 = scalar_lea.sflag [#allocation6], %s575
        %s577 = sand.u32 %s82, 1
        %s578 = scalar_lea.vmem [#allocation5], %s577
        // Predicated region
        $region77: #{tpu_custom_call.1} parent=71 // pred_check
          %p579 = pneg %p95
        $region78: #{tpu_custom_call.1} parent=71 // pred_check_branch
          %581 = sbr.rel (%p579) target = $region80
        $region79: #{tpu_custom_call.1} parent=71 // pred_region
          %583 = dma.done %s576, 16
        $region80: #{tpu_custom_call.1} parent=71 // pred_fallthru
          _
        %s584 = sand.u32 %s36, 1
        %s585 = scalar_lea.sflag [#allocation6], %s584
        %s586 = sand.u32 %s108, 1
        %s587 = scalar_lea.vmem [#allocation7], %s586
        // Predicated region
        $region81: #{tpu_custom_call.1} parent=71 // pred_check
          %p588 = pneg %p121
        $region82: #{tpu_custom_call.1} parent=71 // pred_check_branch
          %590 = sbr.rel (%p588) target = $region84
        $region83: #{tpu_custom_call.1} parent=71 // pred_region
          %592 = dma.done %s585, 16
        $region84: #{tpu_custom_call.1} parent=71 // pred_fallthru
          _
        %s593 = sand.u32 %s238, 1
        %s594 = scalar_lea.sflag [#allocation9], %s593
        %s595 = sand.u32 %s238, 1
        %s596 = scalar_lea.vmem [#allocation8], %s595
        // Predicated region
        $region85: #{tpu_custom_call.1} parent=71 // pred_check
          %p597 = pneg %p251
        $region86: #{tpu_custom_call.1} parent=71 // pred_check_branch
          %599 = sbr.rel (%p597) target = $region88
        $region87: #{tpu_custom_call.1} parent=71 // pred_region
          %601 = dma.done %s594, 16
        $region88: #{tpu_custom_call.1} parent=71 // pred_fallthru
          _
        %s602 = sand.u32 %s56, 1
        %s603 = scalar_lea.sflag [#allocation3], %s602
        %s604 = sand.u32 %s56, 1
        %s605 = smul.addr %s604, 8
        %s606 = scalar_lea.vmem [#allocation2], %s605
        %p607 = pneg %p69
        %p608 = pneg %p66
        %s609 = sand.u32 %s36, 1
        %s610 = scalar_lea.sflag [#allocation6], %s609
        %s611 = sand.u32 %s82, 1
        %s612 = scalar_lea.vmem [#allocation5], %s611
        %p613 = pneg %p95
        %p614 = pneg %p92
        %s615 = sand.u32 %s36, 1
        %s616 = scalar_lea.sflag [#allocation6], %s615
        %s617 = sand.u32 %s108, 1
        %s618 = scalar_lea.vmem [#allocation7], %s617
        %p619 = pneg %p121
        %p620 = pneg %p118
        %p621 = scmp.lt.s32.totalorder %s41, 1
        %s622 = scalar_select %p621, %s41, 1
        %s623 = smul.addr %s622, 4
        %s624 = smul.addr %s623, 4
        %s625 = scalar_lea.vmem %s3, %s624
        %p626 = pneg %p147
        %p627 = pneg %p144
        %p628 = scmp.lt.s32.totalorder %s41, 1
        %s629 = scalar_select %p628, %s41, 1
        %s630 = scalar_lea.vmem %s4, %s629
        %p631 = pneg %p173
        %p632 = pneg %p170
        %p633 = scmp.lt.s32.totalorder %s41, 1
        %s634 = scalar_select %p633, %s41, 1
        %s635 = smul.addr %s634, 4
        %s636 = smul.addr %s635, 4
        %s637 = scalar_lea.vmem %s5, %s636
        %p638 = pneg %p199
        %p639 = pneg %p196
        %p640 = scmp.lt.s32.totalorder %s41, 1
        %s641 = scalar_select %p640, %s41, 1
        %s642 = scalar_lea.vmem %s6, %s641
        %p643 = pneg %p225
        %p644 = pneg %p222
        %s645 = sand.u32 %s238, 1
        %s646 = scalar_lea.sflag [#allocation9], %s645
        %s647 = sand.u32 %s238, 1
        %s648 = scalar_lea.vmem [#allocation8], %s647
        %p649 = pneg %p251
        %p650 = pneg %p248
        %p651 = scmp.lt.s32.totalorder %s41, 1
        %s652 = scalar_select %p651, %s41, 1
        %s653 = scalar_lea.vmem %s8, %s652
        %p654 = pneg %p277
        %p655 = pneg %p274
        %p656 = scmp.lt.s32.totalorder %s41, 1
        %s657 = scalar_select %p656, %s41, 1
        %s658 = smul.addr %s657, 4
        %s659 = smul.addr %s658, 4
        %s660 = scalar_lea.vmem %s9, %s659
        %p661 = pneg %p303
        %p662 = pneg %p300
        %p663 = scmp.lt.s32.totalorder %s41, 1
        %s664 = scalar_select %p663, %s41, 1
        %s665 = scalar_lea.vmem %s10, %s664
        %p666 = pneg %p329
        %p667 = pneg %p326
        %p668 = scmp.lt.s32.totalorder %s41, 1
        %s669 = scalar_select %p668, %s41, 1
        %s670 = smul.addr %s669, 8
        %s671 = smul.addr %s670, 4
        %s672 = scalar_lea.vmem %s11, %s671
        %p673 = pneg %p355
        %p674 = pneg %p352
        %p675 = scmp.lt.s32.totalorder %s41, 1
        %s676 = scalar_select %p675, %s41, 1
        %s677 = scalar_lea.vmem %s12, %s676
        %p678 = pneg %p381
        %p679 = pneg %p378
        %p680 = pneg %p407
        %p681 = pneg %p404
        %s682 = sand.u32 %s394, 1
        %s683 = scalar_lea.sflag [#allocation4], %s682
        %s684 = sand.u32 %s394, 1
        %s685 = smul.addr %s684, 8
        %s686 = scalar_lea.vmem [#allocation10], %s685
        %p687 = scmp.lt.s32.totalorder %s41, 1
        %s688 = scalar_select %p687, %s41, 1
        %s689 = smul.addr %s688, 4
        %s690 = smul.addr %s689, 4
        %s691 = scalar_lea.vmem %s3, %s690
        %p692 = scmp.lt.s32.totalorder %s41, 1
        %s693 = scalar_select %p692, %s41, 1
        %s694 = scalar_lea.vmem %s4, %s693
        %p695 = scmp.lt.s32.totalorder %s41, 1
        %s696 = scalar_select %p695, %s41, 1
        %s697 = smul.addr %s696, 4
        %s698 = smul.addr %s697, 4
        %s699 = scalar_lea.vmem %s5, %s698
        %p700 = scmp.lt.s32.totalorder %s41, 1
        %s701 = scalar_select %p700, %s41, 1
        %s702 = scalar_lea.vmem %s6, %s701
        %p703 = scmp.lt.s32.totalorder %s41, 1
        %s704 = scalar_select %p703, %s41, 1
        %s705 = scalar_lea.vmem %s8, %s704
        %p706 = scmp.lt.s32.totalorder %s41, 1
        %s707 = scalar_select %p706, %s41, 1
        %s708 = smul.addr %s707, 4
        %s709 = smul.addr %s708, 4
        %s710 = scalar_lea.vmem %s9, %s709
        %p711 = scmp.lt.s32.totalorder %s41, 1
        %s712 = scalar_select %p711, %s41, 1
        %s713 = scalar_lea.vmem %s10, %s712
        %p714 = scmp.lt.s32.totalorder %s41, 1
        %s715 = scalar_select %p714, %s41, 1
        %s716 = smul.addr %s715, 8
        %s717 = smul.addr %s716, 4
        %s718 = scalar_lea.vmem %s11, %s717
        %p719 = scmp.lt.s32.totalorder %s41, 1
        %s720 = scalar_select %p719, %s41, 1
        %s721 = scalar_lea.vmem %s12, %s720
        %p723 = scmp.eq.s32.totalorder %s41, 0
        // Predicated region
        $region89: #{tpu_custom_call.1} parent=71 // pred_check
          %p724 = pneg %p723
        $region90: #{tpu_custom_call.1} parent=71 // pred_check_branch
          %726 = sbr.rel (%p724) target = $region92
        $region91: #{tpu_custom_call.1} parent=71 // pred_region
          %v727 = vld [vmem:[%s569] sm:$0xff]
          %vm728 = vcmask 261120
          %729 = vst.msk [vmem:[%s686] sm:$0xff] %vm728, %v727
        $region92: #{tpu_custom_call.1} parent=71 // pred_fallthru
          _
        %v730 = vld [vmem:[%s686] sm:$0xff]
        %v731 = vld [vmem:[%s578] sm:$0x1]
        %v732 = vld [vmem:[%s587] sm:$0x1]
        %vm733 = vcmask 261120
        %v734 = vsel %vm733, %v730, 0.0
        %735 = vadd.xlane.f32.xlu0 %v734
        %v736 = vpop.xlane.xlu0 %735
        %v737 = vrcp.pop 32.0
        %v738 = vmul.f32 32.0, %v737
        %v739 = vsub.f32 1.0, %v738
        %v740 = vmul.f32 %v737, %v739
        %v741 = vadd.f32 %v737, %v740
        %vm742 = vweird.f32 %v737
        %v743 = vsel %vm742, %v737, %v741
        %v744 = vmul.f32 %v736, %v743
        %v745 = vsub.f32 %v730, %v744
        %v746 = vmul.f32 %v745, %v745
        %v747 = vsel %vm733, %v746, 0.0
        %748 = vadd.xlane.f32.xlu0 %v747
        %v749 = vpop.xlane.xlu0 %748
        %v750 = vmul.f32 %v749, %v743
        %v751 = vadd.f32 %v750, 1e-05
        %v752 = vrsqrt.pop %v751
        %v753 = vmul.f32 %v752, %v751
        %v754 = vmul.f32 %v753, %v752
        %v755 = vmul.f32 0.5, %v754
        %v756 = vsub.f32 1.5, %v755
        %v757 = vmul.f32 %v752, %v756
        %vm758 = vweird.f32 %v751
        %vm759 = vweird.f32 %v752
        %vm760 = vmor %vm758, %vm759
        %v761 = vsel %vm760, %v752, %v757
        %v762 = vmul.f32 %v745, %v761
        %v764 = vperm.slane %v731, 0
        %v766 = vmul.f32 %v762, %v764
        %v768 = vperm.slane %v732, 0
        %v770 = vadd.f32 %v766, %v768
        %v771 = vpack.c.bf16 %v770, %v770
        %v772 = vld [vmem:[%s691] sm:$0xf]
        %v773 = vld [vmem:[%s691 + $0x4] sm:$0xf]
        %v774 = vld [vmem:[%s691 + $0x8] sm:$0xf]
        %v775 = vld [vmem:[%s691 + $0xc] sm:$0xf]
        %v776 = vld [vmem:[%s694] sm:$0x1]
        %v778 = vperm.slane %v776, 0
        %v784 = vunpack.c.l.b16 %v772
        %v785 = vunpack.c.l.b16 %v773
        %v786 = vunpack.c.l.b16 %v774
        %v787 = vunpack.c.l.b16 %v775
        %v788 = vpack.c.b16 %v785, %v784
        %v789 = vpack.c.b16 %v787, %v786
        %v793 = vsel %vm733, %v771, 0
        %795 = vmatpush.bf16.msra.mxu0 0
        %796 = vmatpush.bf16.msra.mxu0 0
        %797 = vmatpush.bf16.msra.mxu0 0
        %798 = vmatpush.bf16.msra.mxu0 0
        %799 = vmatpush.bf16.msra.mxu0 0
        %800 = vmatpush.bf16.msra.mxu0 0
        %801 = vmatpush.bf16.msra.mxu0 %v789
        %802 = vmatpush.bf16.msra.mxu0 %v788
        %803 = vmatmul.bf16.gmra.mxu0 %v793
        %v804 = vpop.f32.mrf.mxu0
        %v805 = vadd.f32 %v778, %v804
        %v806 = vpop.f32.mrf.mxu0
        %807 = vdwg.mxu0
        %v808 = vmul.f32 %v805, 0.35355338
        %810 = vrot.lane.b32.xlu0 %v808, 120
        %v811 = vpop.permute.xlu0 %810
        %813 = vrot.lane.b32.xlu0 %v808, 112
        %v814 = vpop.permute.xlu0 %813
        %816 = vrot.lane.b32.xlu0 %v808, 104
        %v817 = vpop.permute.xlu0 %816
        %v819 = vrot.slane %v814, 4
        %vm820 = vcmask 1047556
        %v821 = vsel %vm820, %v819, %v808
        %v822 = vrot.slane %v808, 4
        %v823 = vsel %vm820, %v814, %v822
        %v825 = vunpack.c.l.s4 1983009808
        %v826 = vunpack.c.0.s8 %v825
        %v827 = vperm.slane %v821, %v826
        %v829 = vunpack.c.l.s4 1983009808
        %v830 = vunpack.c.0.s8 %v829
        %v831 = vperm.slane %v823, %v830
        %v832 = vrot.slane %v817, 4
        %v833 = vsel %vm820, %v832, %v811
        %v834 = vrot.slane %v811, 4
        %v835 = vsel %vm820, %v817, %v834
        %v837 = vunpack.c.l.s4 1983009808
        %v838 = vunpack.c.0.s8 %v837
        %v839 = vperm.slane %v833, %v838
        %v841 = vunpack.c.l.s4 1983009808
        %v842 = vunpack.c.0.s8 %v841
        %v843 = vperm.slane %v835, %v842
        %v844 = vrot.slane %v839, 4
        %v845 = vsel %vm820, %v844, %v827
        %v846 = vrot.slane %v827, 4
        %v847 = vsel %vm820, %v839, %v846
        %v849 = vunpack.c.l.s4 1934713408
        %v850 = vunpack.c.0.s8 %v849
        %v851 = vperm.slane %v845, %v850
        %v853 = vunpack.c.l.s4 1934713408
        %v854 = vunpack.c.0.s8 %v853
        %v855 = vperm.slane %v847, %v854
        %v856 = vrot.slane %v843, 4
        %v857 = vsel %vm820, %v856, %v831
        %v858 = vrot.slane %v831, 4
        %v859 = vsel %vm820, %v843, %v858
        %v861 = vunpack.c.l.s4 1934713408
        %v862 = vunpack.c.0.s8 %v861
        %v863 = vperm.slane %v857, %v862
        %v865 = vunpack.c.l.s4 1934713408
        %v866 = vunpack.c.0.s8 %v865
        %v867 = vperm.slane %v859, %v866
        %v868 = vrot.slane %v851, 4
        %v869 = vsel %vm820, 0.0, %v868
        %v870 = vrot.slane %v855, 4
        %v871 = vsel %vm820, 0.0, %v870
        %v872 = vrot.slane %v863, 4
        %v873 = vsel %vm820, 0.0, %v872
        %v874 = vrot.slane %v867, 4
        %v875 = vsel %vm820, 0.0, %v874
        %v876 = vsel %vm820, %v870, %v851
        %v878 = vunpack.c.l.s4 1983009808
        %v879 = vunpack.c.0.s8 %v878
        %v880 = vperm.slane %v876, %v879
        %v881 = vrot.slane %v871, 4
        %v882 = vsel %vm820, %v881, %v869
        %v884 = vunpack.c.l.s4 1983009808
        %v885 = vunpack.c.0.s8 %v884
        %v886 = vperm.slane %v882, %v885
        %v887 = vsel %vm820, %v874, %v863
        %v889 = vunpack.c.l.s4 1983009808
        %v890 = vunpack.c.0.s8 %v889
        %v891 = vperm.slane %v887, %v890
        %v892 = vrot.slane %v875, 4
        %v893 = vsel %vm820, %v892, %v873
        %v895 = vunpack.c.l.s4 1983009808
        %v896 = vunpack.c.0.s8 %v895
        %v897 = vperm.slane %v893, %v896
        %v898 = vrot.slane %v886, 4
        %v899 = vsel %vm820, %v898, %v880
        %v900 = vrot.slane %v880, 4
        %v901 = vsel %vm820, %v886, %v900
        %v903 = vunpack.c.l.s4 1934713408
        %v904 = vunpack.c.0.s8 %v903
        %v905 = vperm.slane %v899, %v904
        %v907 = vunpack.c.l.s4 1934713408
        %v908 = vunpack.c.0.s8 %v907
        %v909 = vperm.slane %v901, %v908
        %v910 = vrot.slane %v897, 4
        %v911 = vsel %vm820, %v910, %v891
        %v912 = vrot.slane %v891, 4
        %v913 = vsel %vm820, %v897, %v912
        %v915 = vunpack.c.l.s4 1934713408
        %v916 = vunpack.c.0.s8 %v915
        %v917 = vperm.slane %v911, %v916
        %v919 = vunpack.c.l.s4 1934713408
        %v920 = vunpack.c.0.s8 %v919
        %v921 = vperm.slane %v913, %v920
        %v922 = vrot.slane %v917, 4
        %v923 = vsel %vm820, %v922, %v905
        %v924 = vrot.slane %v905, 4
        %v925 = vsel %vm820, %v917, %v924
        %v926 = vrot.slane %v921, 4
        %v927 = vsel %vm820, %v926, %v909
        %v928 = vrot.slane %v909, 4
        %v929 = vsel %vm820, %v921, %v928
        %v930 = vpack.c.bf16 %v923, %v923
        %v931 = vpack.c.bf16 %v925, %v925
        %v932 = vpack.c.bf16 %v927, %v927
        %v933 = vpack.c.bf16 %v929, %v929
        %935 = vrot.lane.b32.xlu0 %v805, 120
        %v936 = vpop.permute.xlu0 %935
        %937 = vrot.lane.b32.xlu0 %v805, 112
        %v938 = vpop.permute.xlu0 %937
        %939 = vrot.lane.b32.xlu0 %v805, 104
        %v940 = vpop.permute.xlu0 %939
        %941 = vrot.lane.b32.xlu0 %v805, 96
        %v942 = vpop.permute.xlu0 %941
        %943 = vrot.lane.b32.xlu0 %v936, 96
        %v944 = vpop.permute.xlu0 %943
        %945 = vrot.lane.b32.xlu0 %v938, 96
        %v946 = vpop.permute.xlu0 %945
        %947 = vrot.lane.b32.xlu0 %v940, 96
        %v948 = vpop.permute.xlu0 %947
        %v953 = vrot.slane %v946, 4
        %v954 = vsel %vm820, %v953, %v942
        %v955 = vrot.slane %v942, 4
        %v956 = vsel %vm820, %v946, %v955
        %v958 = vunpack.c.l.s4 1983009808
        %v959 = vunpack.c.0.s8 %v958
        %v960 = vperm.slane %v954, %v959
        %v962 = vunpack.c.l.s4 1983009808
        %v963 = vunpack.c.0.s8 %v962
        %v964 = vperm.slane %v956, %v963
        %v965 = vrot.slane %v948, 4
        %v966 = vsel %vm820, %v965, %v944
        %v967 = vrot.slane %v944, 4
        %v968 = vsel %vm820, %v948, %v967
        %v970 = vunpack.c.l.s4 1983009808
        %v971 = vunpack.c.0.s8 %v970
        %v972 = vperm.slane %v966, %v971
        %v974 = vunpack.c.l.s4 1983009808
        %v975 = vunpack.c.0.s8 %v974
        %v976 = vperm.slane %v968, %v975
        %v977 = vrot.slane %v972, 4
        %v978 = vsel %vm820, %v977, %v960
        %v979 = vrot.slane %v960, 4
        %v980 = vsel %vm820, %v972, %v979
        %v982 = vunpack.c.l.s4 1934713408
        %v983 = vunpack.c.0.s8 %v982
        %v984 = vperm.slane %v978, %v983
        %v986 = vunpack.c.l.s4 1934713408
        %v987 = vunpack.c.0.s8 %v986
        %v988 = vperm.slane %v980, %v987
        %v989 = vrot.slane %v976, 4
        %v990 = vsel %vm820, %v989, %v964
        %v991 = vrot.slane %v964, 4
        %v992 = vsel %vm820, %v976, %v991
        %v994 = vunpack.c.l.s4 1934713408
        %v995 = vunpack.c.0.s8 %v994
        %v996 = vperm.slane %v990, %v995
        %v998 = vunpack.c.l.s4 1934713408
        %v999 = vunpack.c.0.s8 %v998
        %v1000 = vperm.slane %v992, %v999
        %v1001 = vrot.slane %v984, 4
        %v1002 = vsel %vm820, 0.0, %v1001
        %v1003 = vrot.slane %v988, 4
        %v1004 = vsel %vm820, 0.0, %v1003
        %v1005 = vrot.slane %v996, 4
        %v1006 = vsel %vm820, 0.0, %v1005
        %v1007 = vrot.slane %v1000, 4
        %v1008 = vsel %vm820, 0.0, %v1007
        %v1009 = vsel %vm820, %v1003, %v984
        %v1011 = vunpack.c.l.s4 1983009808
        %v1012 = vunpack.c.0.s8 %v1011
        %v1013 = vperm.slane %v1009, %v1012
        %v1014 = vrot.slane %v1004, 4
        %v1015 = vsel %vm820, %v1014, %v1002
        %v1017 = vunpack.c.l.s4 1983009808
        %v1018 = vunpack.c.0.s8 %v1017
        %v1019 = vperm.slane %v1015, %v1018
        %v1020 = vsel %vm820, %v1007, %v996
        %v1022 = vunpack.c.l.s4 1983009808
        %v1023 = vunpack.c.0.s8 %v1022
        %v1024 = vperm.slane %v1020, %v1023
        %v1025 = vrot.slane %v1008, 4
        %v1026 = vsel %vm820, %v1025, %v1006
        %v1028 = vunpack.c.l.s4 1983009808
        %v1029 = vunpack.c.0.s8 %v1028
        %v1030 = vperm.slane %v1026, %v1029
        %v1031 = vrot.slane %v1019, 4
        %v1032 = vsel %vm820, %v1031, %v1013
        %v1033 = vrot.slane %v1013, 4
        %v1034 = vsel %vm820, %v1019, %v1033
        %v1036 = vunpack.c.l.s4 1934713408
        %v1037 = vunpack.c.0.s8 %v1036
        %v1038 = vperm.slane %v1032, %v1037
        %v1040 = vunpack.c.l.s4 1934713408
        %v1041 = vunpack.c.0.s8 %v1040
        %v1042 = vperm.slane %v1034, %v1041
        %v1043 = vrot.slane %v1030, 4
        %v1044 = vsel %vm820, %v1043, %v1024
        %v1045 = vrot.slane %v1024, 4
        %v1046 = vsel %vm820, %v1030, %v1045
        %v1048 = vunpack.c.l.s4 1934713408
        %v1049 = vunpack.c.0.s8 %v1048
        %v1050 = vperm.slane %v1044, %v1049
        %v1052 = vunpack.c.l.s4 1934713408
        %v1053 = vunpack.c.0.s8 %v1052
        %v1054 = vperm.slane %v1046, %v1053
        %v1055 = vrot.slane %v1050, 4
        %v1056 = vsel %vm820, %v1055, %v1038
        %v1057 = vrot.slane %v1038, 4
        %v1058 = vsel %vm820, %v1050, %v1057
        %v1059 = vrot.slane %v1054, 4
        %v1060 = vsel %vm820, %v1059, %v1042
        %v1061 = vrot.slane %v1042, 4
        %v1062 = vsel %vm820, %v1054, %v1061
        %v1063 = vpack.c.bf16 %v1056, %v1056
        %v1064 = vpack.c.bf16 %v1058, %v1058
        %v1065 = vpack.c.bf16 %v1060, %v1060
        %v1066 = vpack.c.bf16 %v1062, %v1062
        %1067 = vrot.lane.b32.xlu0 %v805, 64
        %v1068 = vpop.permute.xlu0 %1067
        %1069 = vrot.lane.b32.xlu0 %v936, 64
        %v1070 = vpop.permute.xlu0 %1069
        %1071 = vrot.lane.b32.xlu0 %v938, 64
        %v1072 = vpop.permute.xlu0 %1071
        %1073 = vrot.lane.b32.xlu0 %v940, 64
        %v1074 = vpop.permute.xlu0 %1073
        %v1079 = vrot.slane %v1072, 4
        %v1080 = vsel %vm820, %v1079, %v1068
        %v1081 = vrot.slane %v1068, 4
        %v1082 = vsel %vm820, %v1072, %v1081
        %v1084 = vunpack.c.l.s4 1983009808
        %v1085 = vunpack.c.0.s8 %v1084
        %v1086 = vperm.slane %v1080, %v1085
        %v1088 = vunpack.c.l.s4 1983009808
        %v1089 = vunpack.c.0.s8 %v1088
        %v1090 = vperm.slane %v1082, %v1089
        %v1091 = vrot.slane %v1074, 4
        %v1092 = vsel %vm820, %v1091, %v1070
        %v1093 = vrot.slane %v1070, 4
        %v1094 = vsel %vm820, %v1074, %v1093
        %v1096 = vunpack.c.l.s4 1983009808
        %v1097 = vunpack.c.0.s8 %v1096
        %v1098 = vperm.slane %v1092, %v1097
        %v1100 = vunpack.c.l.s4 1983009808
        %v1101 = vunpack.c.0.s8 %v1100
        %v1102 = vperm.slane %v1094, %v1101
        %v1103 = vrot.slane %v1098, 4
        %v1104 = vsel %vm820, %v1103, %v1086
        %v1105 = vrot.slane %v1086, 4
        %v1106 = vsel %vm820, %v1098, %v1105
        %v1108 = vunpack.c.l.s4 1934713408
        %v1109 = vunpack.c.0.s8 %v1108
        %v1110 = vperm.slane %v1104, %v1109
        %v1112 = vunpack.c.l.s4 1934713408
        %v1113 = vunpack.c.0.s8 %v1112
        %v1114 = vperm.slane %v1106, %v1113
        %v1115 = vrot.slane %v1102, 4
        %v1116 = vsel %vm820, %v1115, %v1090
        %v1117 = vrot.slane %v1090, 4
        %v1118 = vsel %vm820, %v1102, %v1117
        %v1120 = vunpack.c.l.s4 1934713408
        %v1121 = vunpack.c.0.s8 %v1120
        %v1122 = vperm.slane %v1116, %v1121
        %v1124 = vunpack.c.l.s4 1934713408
        %v1125 = vunpack.c.0.s8 %v1124
        %v1126 = vperm.slane %v1118, %v1125
        %v1127 = vrot.slane %v1110, 4
        %v1128 = vsel %vm820, 0.0, %v1127
        %v1129 = vrot.slane %v1114, 4
        %v1130 = vsel %vm820, 0.0, %v1129
        %v1131 = vrot.slane %v1122, 4
        %v1132 = vsel %vm820, 0.0, %v1131
        %v1133 = vrot.slane %v1126, 4
        %v1134 = vsel %vm820, 0.0, %v1133
        %v1135 = vsel %vm820, %v1129, %v1110
        %v1137 = vunpack.c.l.s4 1983009808
        %v1138 = vunpack.c.0.s8 %v1137
        %v1139 = vperm.slane %v1135, %v1138
        %v1140 = vrot.slane %v1130, 4
        %v1141 = vsel %vm820, %v1140, %v1128
        %v1143 = vunpack.c.l.s4 1983009808
        %v1144 = vunpack.c.0.s8 %v1143
        %v1145 = vperm.slane %v1141, %v1144
        %v1146 = vsel %vm820, %v1133, %v1122
        %v1148 = vunpack.c.l.s4 1983009808
        %v1149 = vunpack.c.0.s8 %v1148
        %v1150 = vperm.slane %v1146, %v1149
        %v1151 = vrot.slane %v1134, 4
        %v1152 = vsel %vm820, %v1151, %v1132
        %v1154 = vunpack.c.l.s4 1983009808
        %v1155 = vunpack.c.0.s8 %v1154
        %v1156 = vperm.slane %v1152, %v1155
        %v1157 = vrot.slane %v1145, 4
        %v1158 = vsel %vm820, %v1157, %v1139
        %v1159 = vrot.slane %v1139, 4
        %v1160 = vsel %vm820, %v1145, %v1159
        %v1162 = vunpack.c.l.s4 1934713408
        %v1163 = vunpack.c.0.s8 %v1162
        %v1164 = vperm.slane %v1158, %v1163
        %v1166 = vunpack.c.l.s4 1934713408
        %v1167 = vunpack.c.0.s8 %v1166
        %v1168 = vperm.slane %v1160, %v1167
        %v1169 = vrot.slane %v1156, 4
        %v1170 = vsel %vm820, %v1169, %v1150
        %v1171 = vrot.slane %v1150, 4
        %v1172 = vsel %vm820, %v1156, %v1171
        %v1174 = vunpack.c.l.s4 1934713408
        %v1175 = vunpack.c.0.s8 %v1174
        %v1176 = vperm.slane %v1170, %v1175
        %v1178 = vunpack.c.l.s4 1934713408
        %v1179 = vunpack.c.0.s8 %v1178
        %v1180 = vperm.slane %v1172, %v1179
        %v1181 = vrot.slane %v1176, 4
        %v1182 = vsel %vm820, %v1181, %v1164
        %v1183 = vrot.slane %v1164, 4
        %v1184 = vsel %vm820, %v1176, %v1183
        %v1185 = vrot.slane %v1180, 4
        %v1186 = vsel %vm820, %v1185, %v1168
        %v1187 = vrot.slane %v1168, 4
        %v1188 = vsel %vm820, %v1180, %v1187
        %v1189 = vpack.c.bf16 %v1182, %v1182
        %v1190 = vpack.c.bf16 %v1184, %v1184
        %v1191 = vpack.c.bf16 %v1186, %v1186
        %v1192 = vpack.c.bf16 %v1188, %v1188
        %vm1193 = vcmask 64512
        %v1195 = vsel %vm1193, %v930, 0
        %v1198 = vsel %vm1193, %v1063, 0
        %1200 = vmatpush.bf16.xpose.msra.mxu0 0
        %1201 = vmatpush.bf16.xpose.msra.mxu0 0
        %1202 = vmatpush.bf16.xpose.msra.mxu0 0
        %1203 = vmatpush.bf16.xpose.msra.mxu0 0
        %1204 = vmatpush.bf16.xpose.msra.mxu0 0
        %1205 = vmatpush.bf16.xpose.msra.mxu0 0
        %1206 = vmatpush.bf16.xpose.msra.mxu0 0
        %1207 = vmatpush.bf16.xpose.msra.mxu0 %v1198
        %1208 = vmatmul.bf16.gmra.mxu0 %v1195
        %v1209 = vpop.f32.mrf.mxu0
        %v1210 = vadd.f32 0.0, %v1209
        %v1211 = vpop.f32.mrf.mxu0
        %1212 = vdwg.mxu0
        %v1214 = vsel %vm1193, %v931, 0
        %v1217 = vsel %vm1193, %v1064, 0
        %1219 = vmatpush.bf16.xpose.msra.mxu0 0
        %1220 = vmatpush.bf16.xpose.msra.mxu0 0
        %1221 = vmatpush.bf16.xpose.msra.mxu0 0
        %1222 = vmatpush.bf16.xpose.msra.mxu0 0
        %1223 = vmatpush.bf16.xpose.msra.mxu0 0
        %1224 = vmatpush.bf16.xpose.msra.mxu0 0
        %1225 = vmatpush.bf16.xpose.msra.mxu0 0
        %1226 = vmatpush.bf16.xpose.msra.mxu0 %v1217
        %1227 = vmatmul.bf16.gmra.mxu0 %v1214
        %v1228 = vpop.f32.mrf.mxu0
        %v1229 = vadd.f32 0.0, %v1228
        %v1230 = vpop.f32.mrf.mxu0
        %1231 = vdwg.mxu0
        %v1233 = vsel %vm1193, %v932, 0
        %v1236 = vsel %vm1193, %v1065, 0
        %1238 = vmatpush.bf16.xpose.msra.mxu0 0
        %1239 = vmatpush.bf16.xpose.msra.mxu0 0
        %1240 = vmatpush.bf16.xpose.msra.mxu0 0
        %1241 = vmatpush.bf16.xpose.msra.mxu0 0
        %1242 = vmatpush.bf16.xpose.msra.mxu0 0
        %1243 = vmatpush.bf16.xpose.msra.mxu0 0
        %1244 = vmatpush.bf16.xpose.msra.mxu0 0
        %1245 = vmatpush.bf16.xpose.msra.mxu0 %v1236
        %1246 = vmatmul.bf16.gmra.mxu0 %v1233
        %v1247 = vpop.f32.mrf.mxu0
        %v1248 = vadd.f32 0.0, %v1247
        %v1249 = vpop.f32.mrf.mxu0
        %1250 = vdwg.mxu0
        %v1252 = vsel %vm1193, %v933, 0
        %v1255 = vsel %vm1193, %v1066, 0
        %1257 = vmatpush.bf16.xpose.msra.mxu0 0
        %1258 = vmatpush.bf16.xpose.msra.mxu0 0
        %1259 = vmatpush.bf16.xpose.msra.mxu0 0
        %1260 = vmatpush.bf16.xpose.msra.mxu0 0
        %1261 = vmatpush.bf16.xpose.msra.mxu0 0
        %1262 = vmatpush.bf16.xpose.msra.mxu0 0
        %1263 = vmatpush.bf16.xpose.msra.mxu0 0
        %1264 = vmatpush.bf16.xpose.msra.mxu0 %v1255
        %1265 = vmatmul.bf16.gmra.mxu0 %v1252
        %v1266 = vpop.f32.mrf.mxu0
        %v1267 = vadd.f32 0.0, %v1266
        %v1268 = vpop.f32.mrf.mxu0
        %1269 = vdwg.mxu0
        %v1270 = vsel %vm1193, %v1210, -inf
        %1271 = vmax.xlane.f32.xlu0 %v1270
        %v1272 = vpop.xlane.xlu0 %1271
        %v1273 = vsel %vm1193, %v1229, -inf
        %1274 = vmax.xlane.f32.xlu0 %v1273
        %v1275 = vpop.xlane.xlu0 %1274
        %v1276 = vsel %vm1193, %v1248, -inf
        %1277 = vmax.xlane.f32.xlu0 %v1276
        %v1278 = vpop.xlane.xlu0 %1277
        %v1279 = vsel %vm1193, %v1267, -inf
        %1280 = vmax.xlane.f32.xlu0 %v1279
        %v1281 = vpop.xlane.xlu0 %1280
        %v1282 = vsub.f32 %v1210, %v1272
        %v1283 = vsub.f32 %v1229, %v1275
        %v1284 = vsub.f32 %v1248, %v1278
        %v1285 = vsub.f32 %v1267, %v1281
        %v1286 = vmul.f32 %v1282, 1.442695
        %v1287 = vpow.pop %v1286
        %v1288 = vmul.f32 %v1283, 1.442695
        %v1289 = vpow.pop %v1288
        %v1290 = vmul.f32 %v1284, 1.442695
        %v1291 = vpow.pop %v1290
        %v1292 = vmul.f32 %v1285, 1.442695
        %v1293 = vpow.pop %v1292
        %v1294 = vsel %vm1193, %v1287, 0.0
        %1295 = vadd.xlane.f32.xlu0 %v1294
        %v1296 = vpop.xlane.xlu0 %1295
        %v1297 = vsel %vm1193, %v1289, 0.0
        %1298 = vadd.xlane.f32.xlu0 %v1297
        %v1299 = vpop.xlane.xlu0 %1298
        %v1300 = vsel %vm1193, %v1291, 0.0
        %1301 = vadd.xlane.f32.xlu0 %v1300
        %v1302 = vpop.xlane.xlu0 %1301
        %v1303 = vsel %vm1193, %v1293, 0.0
        %1304 = vadd.xlane.f32.xlu0 %v1303
        %v1305 = vpop.xlane.xlu0 %1304
        %v1306 = vrcp.pop %v1296
        %v1307 = vrcp.pop %v1299
        %v1308 = vrcp.pop %v1302
        %v1309 = vrcp.pop %v1305
        %v1310 = vmul.f32 %v1287, %v1306
        %v1311 = vmul.f32 %v1289, %v1307
        %v1312 = vmul.f32 %v1291, %v1308
        %v1313 = vmul.f32 %v1293, %v1309
        %v1314 = vpack.c.bf16 %v1310, %v1310
        %v1315 = vpack.c.bf16 %v1311, %v1311
        %v1316 = vpack.c.bf16 %v1312, %v1312
        %v1317 = vpack.c.bf16 %v1313, %v1313
        %v1319 = vsel %vm1193, %v1314, 0
        %vm1321 = vcmask 1043456
        %v1323 = vsel %vm1321, %v1189, 0
        %1325 = vmatpush.bf16.msra.mxu0 0
        %1326 = vmatpush.bf16.msra.mxu0 0
        %1327 = vmatpush.bf16.msra.mxu0 0
        %1328 = vmatpush.bf16.msra.mxu0 0
        %1329 = vmatpush.bf16.msra.mxu0 0
        %1330 = vmatpush.bf16.msra.mxu0 0
        %1331 = vmatpush.bf16.msra.mxu0 0
        %1332 = vmatpush.bf16.msra.mxu0 %v1323
        %1333 = vmatmul.bf16.gmra.mxu0 %v1319
        %v1334 = vpop.f32.mrf.mxu0
        %v1335 = vadd.f32 0.0, %v1334
        %v1336 = vpop.f32.mrf.mxu0
        %1337 = vdwg.mxu0
        %v1339 = vsel %vm1193, %v1315, 0
        %v1342 = vsel %vm1321, %v1190, 0
        %1344 = vmatpush.bf16.msra.mxu0 0
        %1345 = vmatpush.bf16.msra.mxu0 0
        %1346 = vmatpush.bf16.msra.mxu0 0
        %1347 = vmatpush.bf16.msra.mxu0 0
        %1348 = vmatpush.bf16.msra.mxu0 0
        %1349 = vmatpush.bf16.msra.mxu0 0
        %1350 = vmatpush.bf16.msra.mxu0 0
        %1351 = vmatpush.bf16.msra.mxu0 %v1342
        %1352 = vmatmul.bf16.gmra.mxu0 %v1339
        %v1353 = vpop.f32.mrf.mxu0
        %v1354 = vadd.f32 0.0, %v1353
        %v1355 = vpop.f32.mrf.mxu0
        %1356 = vdwg.mxu0
        %v1358 = vsel %vm1193, %v1316, 0
        %v1361 = vsel %vm1321, %v1191, 0
        %1363 = vmatpush.bf16.msra.mxu0 0
        %1364 = vmatpush.bf16.msra.mxu0 0
        %1365 = vmatpush.bf16.msra.mxu0 0
        %1366 = vmatpush.bf16.msra.mxu0 0
        %1367 = vmatpush.bf16.msra.mxu0 0
        %1368 = vmatpush.bf16.msra.mxu0 0
        %1369 = vmatpush.bf16.msra.mxu0 0
        %1370 = vmatpush.bf16.msra.mxu0 %v1361
        %1371 = vmatmul.bf16.gmra.mxu0 %v1358
        %v1372 = vpop.f32.mrf.mxu0
        %v1373 = vadd.f32 0.0, %v1372
        %v1374 = vpop.f32.mrf.mxu0
        %1375 = vdwg.mxu0
        %v1377 = vsel %vm1193, %v1317, 0
        %v1380 = vsel %vm1321, %v1192, 0
        %1382 = vmatpush.bf16.msra.mxu0 0
        %1383 = vmatpush.bf16.msra.mxu0 0
        %1384 = vmatpush.bf16.msra.mxu0 0
        %1385 = vmatpush.bf16.msra.mxu0 0
        %1386 = vmatpush.bf16.msra.mxu0 0
        %1387 = vmatpush.bf16.msra.mxu0 0
        %1388 = vmatpush.bf16.msra.mxu0 0
        %1389 = vmatpush.bf16.msra.mxu0 %v1380
        %1390 = vmatmul.bf16.gmra.mxu0 %v1377
        %v1391 = vpop.f32.mrf.mxu0
        %v1392 = vadd.f32 0.0, %v1391
        %v1393 = vpop.f32.mrf.mxu0
        %1394 = vdwg.mxu0
        %v1395 = vrot.slane %v1373, 4
        %v1396 = vsel %vm820, %v1395, %v1335
        %v1397 = vrot.slane %v1335, 4
        %v1398 = vsel %vm820, %v1373, %v1397
        %v1400 = vunpack.c.l.s4 1983009808
        %v1401 = vunpack.c.0.s8 %v1400
        %v1402 = vperm.slane %v1396, %v1401
        %v1404 = vunpack.c.l.s4 1983009808
        %v1405 = vunpack.c.0.s8 %v1404
        %v1406 = vperm.slane %v1398, %v1405
        %v1407 = vrot.slane %v1392, 4
        %v1408 = vsel %vm820, %v1407, %v1354
        %v1409 = vrot.slane %v1354, 4
        %v1410 = vsel %vm820, %v1392, %v1409
        %v1412 = vunpack.c.l.s4 1983009808
        %v1413 = vunpack.c.0.s8 %v1412
        %v1414 = vperm.slane %v1408, %v1413
        %v1416 = vunpack.c.l.s4 1983009808
        %v1417 = vunpack.c.0.s8 %v1416
        %v1418 = vperm.slane %v1410, %v1417
        %v1419 = vrot.slane %v1414, 4
        %v1420 = vsel %vm820, %v1419, %v1402
        %v1421 = vrot.slane %v1402, 4
        %v1422 = vsel %vm820, %v1414, %v1421
        %v1424 = vunpack.c.l.s4 1934713408
        %v1425 = vunpack.c.0.s8 %v1424
        %v1426 = vperm.slane %v1420, %v1425
        %v1428 = vunpack.c.l.s4 1934713408
        %v1429 = vunpack.c.0.s8 %v1428
        %v1430 = vperm.slane %v1422, %v1429
        %v1431 = vrot.slane %v1418, 4
        %v1432 = vsel %vm820, %v1431, %v1406
        %v1433 = vrot.slane %v1406, 4
        %v1434 = vsel %vm820, %v1418, %v1433
        %v1436 = vunpack.c.l.s4 1934713408
        %v1437 = vunpack.c.0.s8 %v1436
        %v1438 = vperm.slane %v1432, %v1437
        %v1440 = vunpack.c.l.s4 1934713408
        %v1441 = vunpack.c.0.s8 %v1440
        %v1442 = vperm.slane %v1434, %v1441
        %v1443 = vrot.slane %v1426, 4
        %v1444 = vsel %vm820, 0.0, %v1443
        %v1445 = vrot.slane %v1430, 4
        %v1446 = vsel %vm820, 0.0, %v1445
        %v1447 = vrot.slane %v1438, 4
        %v1448 = vsel %vm820, 0.0, %v1447
        %v1449 = vrot.slane %v1442, 4
        %v1450 = vsel %vm820, 0.0, %v1449
        %v1451 = vsel %vm820, %v1445, %v1426
        %v1453 = vunpack.c.l.s4 1983009808
        %v1454 = vunpack.c.0.s8 %v1453
        %v1455 = vperm.slane %v1451, %v1454
        %v1456 = vrot.slane %v1446, 4
        %v1457 = vsel %vm820, %v1456, %v1444
        %v1459 = vunpack.c.l.s4 1983009808
        %v1460 = vunpack.c.0.s8 %v1459
        %v1461 = vperm.slane %v1457, %v1460
        %v1462 = vsel %vm820, %v1449, %v1438
        %v1464 = vunpack.c.l.s4 1983009808
        %v1465 = vunpack.c.0.s8 %v1464
        %v1466 = vperm.slane %v1462, %v1465
        %v1467 = vrot.slane %v1450, 4
        %v1468 = vsel %vm820, %v1467, %v1448
        %v1470 = vunpack.c.l.s4 1983009808
        %v1471 = vunpack.c.0.s8 %v1470
        %v1472 = vperm.slane %v1468, %v1471
        %v1473 = vrot.slane %v1461, 4
        %v1474 = vsel %vm820, %v1473, %v1455
        %v1475 = vrot.slane %v1455, 4
        %v1476 = vsel %vm820, %v1461, %v1475
        %v1478 = vunpack.c.l.s4 1934713408
        %v1479 = vunpack.c.0.s8 %v1478
        %v1480 = vperm.slane %v1474, %v1479
        %v1482 = vunpack.c.l.s4 1934713408
        %v1483 = vunpack.c.0.s8 %v1482
        %v1484 = vperm.slane %v1476, %v1483
        %v1485 = vrot.slane %v1472, 4
        %v1486 = vsel %vm820, %v1485, %v1466
        %v1487 = vrot.slane %v1466, 4
        %v1488 = vsel %vm820, %v1472, %v1487
        %v1490 = vunpack.c.l.s4 1934713408
        %v1491 = vunpack.c.0.s8 %v1490
        %v1492 = vperm.slane %v1486, %v1491
        %v1494 = vunpack.c.l.s4 1934713408
        %v1495 = vunpack.c.0.s8 %v1494
        %v1496 = vperm.slane %v1488, %v1495
        %v1497 = vrot.slane %v1492, 4
        %v1498 = vsel %vm820, %v1497, %v1480
        %v1499 = vrot.slane %v1480, 4
        %v1500 = vsel %vm820, %v1492, %v1499
        %v1501 = vrot.slane %v1496, 4
        %v1502 = vsel %vm820, %v1501, %v1484
        %v1503 = vrot.slane %v1484, 4
        %v1504 = vsel %vm820, %v1496, %v1503
        %1506 = vrot.lane.b32.xlu0 %v1500, 8
        %v1507 = vpop.permute.xlu0 %1506
        %1510 = vrot.lane.b32.xlu0 %v1502, 16
        %v1511 = vpop.permute.xlu0 %1510
        %1514 = vrot.lane.b32.xlu0 %v1504, 24
        %v1515 = vpop.permute.xlu0 %1514
        %v1517 = vsel %vm1193, %v1498, %v1507
        %vm1518 = vcmask 130048
        %v1519 = vsel %vm1518, %v1517, %v1511
        %vm1520 = vcmask 195584
        %v1521 = vsel %vm1520, %v1519, %v1515
        %v1522 = vpack.c.bf16 %v1521, %v1521
        %v1523 = vld [vmem:[%s699] sm:$0xf]
        %v1524 = vld [vmem:[%s699 + $0x4] sm:$0xf]
        %v1525 = vld [vmem:[%s699 + $0x8] sm:$0xf]
        %v1526 = vld [vmem:[%s699 + $0xc] sm:$0xf]
        %v1527 = vld [vmem:[%s702] sm:$0x1]
        %v1529 = vperm.slane %v1527, 0
        %v1535 = vunpack.c.l.b16 %v1523
        %v1536 = vunpack.c.l.b16 %v1524
        %v1537 = vunpack.c.l.b16 %v1525
        %v1538 = vunpack.c.l.b16 %v1526
        %v1539 = vpack.c.b16 %v1536, %v1535
        %v1540 = vpack.c.b16 %v1538, %v1537
        %v1544 = vsel %vm733, %v1522, 0
        %1546 = vmatpush.bf16.msra.mxu0 0
        %1547 = vmatpush.bf16.msra.mxu0 0
        %1548 = vmatpush.bf16.msra.mxu0 0
        %1549 = vmatpush.bf16.msra.mxu0 0
        %1550 = vmatpush.bf16.msra.mxu0 0
        %1551 = vmatpush.bf16.msra.mxu0 0
        %1552 = vmatpush.bf16.msra.mxu0 %v1540
        %1553 = vmatpush.bf16.msra.mxu0 %v1539
        %1554 = vmatmul.bf16.gmra.mxu0 %v1544
        %v1555 = vpop.f32.mrf.mxu0
        %v1556 = vadd.f32 %v1529, %v1555
        %v1557 = vpop.f32.mrf.mxu0
        %1558 = vdwg.mxu0
        %v1559 = vadd.f32 %v730, %v1556
        %v1560 = vld [vmem:[%s596] sm:$0x1]
        %v1561 = vld [vmem:[%s705] sm:$0x1]
        %v1562 = vsel %vm733, %v1559, 0.0
        %1563 = vadd.xlane.f32.xlu0 %v1562
        %v1564 = vpop.xlane.xlu0 %1563
        %v1565 = vmul.f32 %v1564, %v743
        %v1566 = vsub.f32 %v1559, %v1565
        %v1567 = vmul.f32 %v1566, %v1566
        %v1568 = vsel %vm733, %v1567, 0.0
        %1569 = vadd.xlane.f32.xlu0 %v1568
        %v1570 = vpop.xlane.xlu0 %1569
        %v1571 = vmul.f32 %v1570, %v743
        %v1572 = vadd.f32 %v1571, 1e-05
        %v1573 = vrsqrt.pop %v1572
        %v1574 = vmul.f32 %v1573, %v1572
        %v1575 = vmul.f32 %v1574, %v1573
        %v1576 = vmul.f32 0.5, %v1575
        %v1577 = vsub.f32 1.5, %v1576
        %v1578 = vmul.f32 %v1573, %v1577
        %vm1579 = vweird.f32 %v1572
        %vm1580 = vweird.f32 %v1573
        %vm1581 = vmor %vm1579, %vm1580
        %v1582 = vsel %vm1581, %v1573, %v1578
        %v1583 = vmul.f32 %v1566, %v1582
        %v1585 = vperm.slane %v1560, 0
        %v1587 = vmul.f32 %v1583, %v1585
        %v1589 = vperm.slane %v1561, 0
        %v1591 = vadd.f32 %v1587, %v1589
        %v1592 = vpack.c.bf16 %v1591, %v1591
        %v1593 = vld [vmem:[%s710] sm:$0xf]
        %v1594 = vld [vmem:[%s710 + $0x4] sm:$0xf]
        %v1595 = vld [vmem:[%s710 + $0x8] sm:$0xf]
        %v1596 = vld [vmem:[%s710 + $0xc] sm:$0xf]
        %v1597 = vld [vmem:[%s713] sm:$0x1]
        %v1599 = vperm.slane %v1597, 0
        %v1605 = vunpack.c.l.b16 %v1593
        %v1606 = vunpack.c.l.b16 %v1594
        %v1607 = vunpack.c.l.b16 %v1595
        %v1608 = vunpack.c.l.b16 %v1596
        %v1609 = vpack.c.b16 %v1606, %v1605
        %v1610 = vpack.c.b16 %v1608, %v1607
        %v1614 = vsel %vm733, %v1592, 0
        %1616 = vmatpush.bf16.msra.mxu0 0
        %1617 = vmatpush.bf16.msra.mxu0 0
        %1618 = vmatpush.bf16.msra.mxu0 0
        %1619 = vmatpush.bf16.msra.mxu0 0
        %1620 = vmatpush.bf16.msra.mxu0 0
        %1621 = vmatpush.bf16.msra.mxu0 0
        %1622 = vmatpush.bf16.msra.mxu0 %v1610
        %1623 = vmatpush.bf16.msra.mxu0 %v1609
        %1624 = vmatmul.bf16.gmra.mxu0 %v1614
        %v1625 = vpop.f32.mrf.mxu0
        %v1626 = vadd.f32 %v1599, %v1625
        %v1627 = vpop.f32.mrf.mxu0
        %1628 = vdwg.mxu0
        %v1629 = vmax.f32 %v1626, 0.0
        %v1630 = vpack.c.bf16 %v1629, %v1629
        %v1631 = vld [vmem:[%s718] sm:$0xf]
        %v1632 = vld [vmem:[%s718 + $0x4] sm:$0xf]
        %v1633 = vld [vmem:[%s718 + $0x8] sm:$0xf]
        %v1634 = vld [vmem:[%s718 + $0xc] sm:$0xf]
        %v1635 = vld [vmem:[%s718 + $0x10] sm:$0xf]
        %v1636 = vld [vmem:[%s718 + $0x14] sm:$0xf]
        %v1637 = vld [vmem:[%s718 + $0x18] sm:$0xf]
        %v1638 = vld [vmem:[%s718 + $0x1c] sm:$0xf]
        %v1639 = vld [vmem:[%s721] sm:$0x1]
        %v1641 = vperm.slane %v1639, 0
        %v1651 = vunpack.c.l.b16 %v1631
        %v1652 = vunpack.c.l.b16 %v1632
        %v1653 = vunpack.c.l.b16 %v1633
        %v1654 = vunpack.c.l.b16 %v1634
        %v1655 = vunpack.c.l.b16 %v1635
        %v1656 = vunpack.c.l.b16 %v1636
        %v1657 = vunpack.c.l.b16 %v1637
        %v1658 = vunpack.c.l.b16 %v1638
        %v1659 = vpack.c.b16 %v1652, %v1651
        %v1660 = vpack.c.b16 %v1654, %v1653
        %v1661 = vpack.c.b16 %v1656, %v1655
        %v1662 = vpack.c.b16 %v1658, %v1657
        %vm1667 = vcmask 523264
        %v1669 = vsel %vm1667, %v1630, 0
        %1671 = vmatpush.bf16.msra.mxu0 0
        %1672 = vmatpush.bf16.msra.mxu0 0
        %1673 = vmatpush.bf16.msra.mxu0 0
        %1674 = vmatpush.bf16.msra.mxu0 0
        %1675 = vmatpush.bf16.msra.mxu0 %v1662
        %1676 = vmatpush.bf16.msra.mxu0 %v1661
        %1677 = vmatpush.bf16.msra.mxu0 %v1660
        %1678 = vmatpush.bf16.msra.mxu0 %v1659
        %1679 = vmatmul.bf16.gmra.mxu0 %v1669
        %v1680 = vpop.f32.mrf.mxu0
        %v1681 = vadd.f32 %v1641, %v1680
        %v1682 = vpop.f32.mrf.mxu0
        %1683 = vdwg.mxu0
        %v1684 = vadd.f32 %v1559, %v1681
        %1685 = vst.msk [vmem:[%s686] sm:$0xff] %vm733, %v1684
        %s1686 = sand.u32 %s394, 1
        %s1687 = scalar_lea.sflag [#allocation4], %s1686
        %s1688 = sand.u32 %s394, 1
        %s1689 = smul.addr %s1688, 8
        %s1690 = scalar_lea.vmem [#allocation10], %s1689
        // Predicated region
        $region93: #{tpu_custom_call.1} parent=71 // pred_check
          %p1691 = pneg %p404
        $region94: #{tpu_custom_call.1} parent=71 // pred_check_branch
          %1693 = sbr.rel (%p1691) target = $region96
        $region95: #{tpu_custom_call.1} parent=71 // pred_region
          %1695 = vsyncadd %s1687, 0
          %s1696 = smul.addr %s40, 8
          %s1697 = scalar_lea.hbm %s13, %s1696
          %s1699 = sshll.u32 %s1690, 4
          %s1700 = int_to_ptr.vmem [resolvable:$true] %s1699
          %s1701 = sshll.u32 %s1697, 4
          %s1702 = int_to_ptr.hbm [resolvable:$true] %s1701
          %1704 = dma.vmem_to_hbm [thread:$0]  %s1700, 128, %s1702, %s1687
        $region96: #{tpu_custom_call.1} parent=71 // pred_fallthru
          _
      $region72: #{tpu_custom_call.1} parent=5 // pred_fallthru
        _
      %p1705 = scmp.le.s32.totalorder 2, %s31
      // Predicated region
      $region97: #{tpu_custom_call.1} parent=5 // pred_check
        %p1706 = pneg %p1705
      $region98: #{tpu_custom_call.1} parent=5 // pred_check_branch
        %1708 = sbr.rel (%p1706) target = $region100
      $region99: #{tpu_custom_call.1} parent=5 // pred_region
        %s1709 = ssub.s32 %s31, 2
        // Predicated region
        $region101: #{tpu_custom_call.1} parent=99 // pred_check
          %p1710 = pneg %p410
        $region102: #{tpu_custom_call.1} parent=99 // pred_check_branch
          %1712 = sbr.rel (%p1710) target = $region104
        $region103: #{tpu_custom_call.1} parent=99 // pred_region
          %s1713 = sand.u32 %s395, 1
          %s1714 = scalar_lea.sflag [#allocation4], %s1713
          %s1715 = sand.u32 %s395, 1
          %s1716 = smul.addr %s1715, 8
          %s1717 = scalar_lea.vmem [#allocation10], %s1716
          %1719 = dma.done %s1714, 128
        $region104: #{tpu_custom_call.1} parent=99 // pred_fallthru
          _
      $region100: #{tpu_custom_call.1} parent=5 // pred_fallthru
        _
    $region6: #{tpu_custom_call.1} parent=1 // loop_footer
      %s35 = sadd.s32 1, %s31
    $region7: #{tpu_custom_call.1} parent=1 // loop_footer_branch
      %30 = sbr.rel target = $region3
    $region8: #{tpu_custom_call.1} parent=1 // loop_exit
      _
    %1720 = vsyncpa [#allocation3], 1
    %s1721 = scalar_lea.sflag [#allocation3], 1
    %1722 = vsyncpa %s1721, 1
    %1723 = vsyncpa [#allocation6], 1
    %s1724 = scalar_lea.sflag [#allocation6], 1
    %1725 = vsyncpa %s1724, 1
    %1726 = vsyncpa [#allocation9], 1
    %s1727 = scalar_lea.sflag [#allocation9], 1
    %1728 = vsyncpa %s1727, 1
    %1729 = vsyncpa [#allocation4], 1
    %s1730 = scalar_lea.sflag [#allocation4], 1
    %1731 = vsyncpa %s1730, 1

</llo_original>
